<compile_context>
chip_gen: v7x
topology: tpu7x:2x2x1
jax: 0.10.0
libtpu: 0.0.40
codegen_flags: <defaults>
</compile_context>

<pallas_src>
import functools

import jax
import jax.numpy as jnp
from jax.experimental import pallas as pl
from jax.experimental.pallas import tpu as pltpu


def _round_up(a, m):
    return ((a + m - 1) // m) * m


def _pick_group_size(dim, nh, target_hidden=512):
    best = 1
    for g in range(1, dim + 1):
        if dim % g == 0 and g * nh <= target_hidden:
            best = g
    return best


# --------------------------------------------------------------------------- #
# Kernel: one (batch tile, dim group) through the fused 4-layer MLP chain.
# --------------------------------------------------------------------------- #
def fused_maf_kernel(x_ref, xg_ref, w1_ref, b1_ref, w2_ref, b2_ref,
                     w3_ref, b3_ref, wst_ref, bst_ref, z_ref, ld_ref,
                     *, compute_dtype, gsize):
    g = pl.program_id(1)

    x = x_ref[...]                                        # (TB, D)  f32
    h = x.astype(compute_dtype)

    def layer(h_c, w_ref, b_ref):
        a = jnp.dot(h_c, w_ref[...],
                    preferred_element_type=jnp.float32) + b_ref[...]
        a = jnp.maximum(a, 0.2 * a)                       # LeakyReLU(0.2), f32 VPU
        return a.astype(compute_dtype)

    h = layer(h, w1_ref, b1_ref)                          # (TB, Hp)
    h = layer(h, w2_ref, b2_ref)
    h = layer(h, w3_ref, b3_ref)

    # Fused s|t output layer: one dot, static lane split.
    st = jnp.dot(h, wst_ref[...],
                 preferred_element_type=jnp.float32) + bst_ref[...]   # (TB, 2G)
    s = st[:, :gsize]
    t = st[:, gsize:]

    # Affine-flow epilogue for this group's dims: z_i = x_i * exp(s_i) + t_i
    z_ref[...] = xg_ref[...] * jnp.exp(s) + t

    # log_det partial, broadcast lane-dense and accumulated across groups
    # (output block index is constant along the "arbitrary" group axis).
    ld = jnp.broadcast_to(jnp.sum(s, axis=1, keepdims=True), ld_ref.shape)

    @pl.when(g == 0)
    def _():
        ld_ref[...] = ld

    @pl.when(g > 0)
    def _():
        ld_ref[...] = ld_ref[...] + ld


# --------------------------------------------------------------------------- #
# Host-side fusion of the D per-dim MLPs into per-group block-diagonal weights.
# Hoist this out of the per-call path (pass the result via `fused=`).
# --------------------------------------------------------------------------- #
def fuse_params(p, *, group_size=None, compute_dtype=jnp.float32,
                hidden_multiple=128):
    D, _, nh = p["w1"].shape
    G = group_size if group_size is not None else _pick_group_size(D, nh)
    assert D % G == 0, "group_size must divide dim"
    NG = D // G
    Hg = G * nh
    Hp = _round_up(Hg, hidden_multiple)     # use 256 for v6e/v7x production sizes
    eyeG = jnp.eye(G, dtype=jnp.float32)

    # First layer: all D inputs -> this group's hidden units.
    w1t = jnp.transpose(p["w1"], (1, 0, 2))                       # (D, D, nh)
    w1g = jnp.transpose(w1t.reshape(D, NG, Hg), (1, 0, 2))        # (NG, D, Hg)
    b1g = p["b1"].reshape(NG, 1, Hg)

    # Hidden layers: block-diagonal within the group.
    w2r = p["w2"].reshape(NG, G, nh, nh)
    w2g = jnp.einsum("ab,gaij->gaibj", eyeG, w2r).reshape(NG, Hg, Hg)
    b2g = p["b2"].reshape(NG, 1, Hg)
    w3r = p["w3"].reshape(NG, G, nh, nh)
    w3g = jnp.einsum("ab,gaij->gaibj", eyeG, w3r).reshape(NG, Hg, Hg)
    b3g = p["b3"].reshape(NG, 1, Hg)

    # Output layer, s and t columns fused side-by-side: (NG, Hg, 2G).
    w4r = p["w4"].reshape(NG, G, nh, 2)
    ws = jnp.einsum("ab,gai->gaib", eyeG, w4r[..., 0]).reshape(NG, Hg, G)
    wt = jnp.einsum("ab,gai->gaib", eyeG, w4r[..., 1]).reshape(NG, Hg, G)
    wst = jnp.concatenate([ws, wt], axis=-1)
    b4r = p["b4"].reshape(NG, G, 2)
    bst = jnp.concatenate([b4r[..., 0], b4r[..., 1]], axis=-1).reshape(NG, 1, 2 * G)

    # Zero-pad hidden width to the MXU lane multiple (exactly preserves the math).
    pad = Hp - Hg
    if pad:
        w1g = jnp.pad(w1g, ((0, 0), (0, 0), (0, pad)))
        b1g = jnp.pad(b1g, ((0, 0), (0, 0), (0, pad)))
        w2g = jnp.pad(w2g, ((0, 0), (0, pad), (0, pad)))
        b2g = jnp.pad(b2g, ((0, 0), (0, 0), (0, pad)))
        w3g = jnp.pad(w3g, ((0, 0), (0, pad), (0, pad)))
        b3g = jnp.pad(b3g, ((0, 0), (0, 0), (0, pad)))
        wst = jnp.pad(wst, ((0, 0), (0, pad), (0, 0)))

    cd = compute_dtype
    weights = (w1g.astype(cd), b1g, w2g.astype(cd), b2g,
               w3g.astype(cd), b3g, wst.astype(cd), bst)   # biases stay f32
    return {"weights": weights, "D": D, "nh": nh, "G": G, "NG": NG, "Hp": Hp,
            "compute_dtype": cd}


# --------------------------------------------------------------------------- #
# Wrapper: (batch tiles, dim groups) grid; permutation / un-padding outside.
# --------------------------------------------------------------------------- #
def slowmaf_forward(x, params=None, order=None, *, fused=None, tb=None,
                    compute_dtype=jnp.float32, group_size=None):
    assert order is not None
    if fused is None:
        fused = fuse_params(params, group_size=group_size,
                            compute_dtype=compute_dtype)
    weights = fused["weights"]
    D, G, NG, Hp = fused["D"], fused["G"], fused["NG"], fused["Hp"]
    cdt = fused["compute_dtype"]

    B = x.shape[0]
    assert x.shape[1] == D

    # Batch tile: multiple of 8, padded batch, >=2 tiles whenever B >= 16 so the
    # "parallel" axis can be split across v7x's two TensorCores.
    if tb is None:
        tb = 256
        if B > 8:
            tb = min(tb, _round_up(pl.cdiv(B, 2), 8))
        tb = min(tb, _round_up(B, 8))
        tb = max(tb, 8)
    B_pad = _round_up(B, tb)
    num_tiles = B_pad // tb

    x = x.astype(jnp.float32)
    x_pad = jnp.pad(x, ((0, B_pad - B), (0, 0)))
    x_grp = x_pad.reshape(B_pad, NG, G).transpose(1, 0, 2)        # (NG, B_pad, G)

    # Explicit VMEM budget: one group's weights (x2 buffers) + activation tiles,
    # floored at 32 MiB, capped at v7x's 64 MiB per TensorCore.
    wbytes = sum(int(w.size) * w.dtype.itemsize for w in weights)
    per_group_w = wbytes // NG
    act_bytes = tb * Hp * 4 * 6 + 2 * tb * (D + 3 * G + 128) * 4
    vmem_limit = int(min(max(2 * per_group_w + act_bytes + (4 << 20), 32 << 20),
                         64 << 20))

    flops = int(B_pad * NG * (2 * D * Hp + 4 * Hp * Hp + 4 * G * Hp)
                + 4 * B_pad * D)
    cost = pl.CostEstimate(
        flops=flops,
        transcendentals=int(B_pad * D),
        bytes_accessed=int(x_pad.size * 4 + x_grp.size * 4 + B_pad * D * 4
                           + B_pad * 128 * 4
                           + wbytes * (1 if NG == 1 else num_tiles)),
    )

    kernel = functools.partial(fused_maf_kernel, compute_dtype=cdt, gsize=G)

    x_spec = pl.BlockSpec((tb, D), lambda i, g: (i, 0))
    xg_spec = pl.BlockSpec((None, tb, G), lambda i, g: (g, i, 0))
    z_spec = pl.BlockSpec((None, tb, G), lambda i, g: (g, i, 0))
    ld_spec = pl.BlockSpec((tb, 128), lambda i, g: (i, 0))       # lane-dense ld
    out_shape = (jax.ShapeDtypeStruct((NG, B_pad, G), jnp.float32),
                 jax.ShapeDtypeStruct((B_pad, 128), jnp.float32))

    def run(single_buffer_weights):
        wkw = {"pipeline_mode": pl.Buffered(1)} if single_buffer_weights else {}

        def wspec(arr):
            nd = arr.ndim
            return pl.BlockSpec((None,) + arr.shape[1:],
                                lambda i, g: (g,) + (0,) * (nd - 1), **wkw)

        return pl.pallas_call(
            kernel,
            grid=(num_tiles, NG),
            in_specs=[x_spec, xg_spec] + [wspec(w) for w in weights],
            out_specs=(z_spec, ld_spec),
            out_shape=out_shape,
            compiler_params=pltpu.CompilerParams(
                dimension_semantics=("parallel", "arbitrary"),
                vmem_limit_bytes=vmem_limit),
            cost_estimate=cost,
        )(x_pad, x_grp, *weights)

    # Single-buffer the weights only when their block never changes (NG == 1);
    # fall back to default double-buffering if Buffered(1) is not supported.
    want_sb = (NG == 1) and hasattr(pl, "Buffered")
    try:
        z_grp, ld = run(want_sb)
    except Exception:
        if not want_sb:
            raise
        z_grp, ld = run(False)

    z_flat = jnp.transpose(z_grp, (1, 0, 2)).reshape(B_pad, D)[:B]
    log_det = ld[:B, 0]

    # Flow permutation z[:, order[i]] = z_i (layout plumbing, outside the kernel).
    inv = [0] * D
    for i, o in enumerate(order):
        inv[o] = i
    z = z_flat[:, jnp.asarray(inv)]
    return z, log_det


# --------------------------------------------------------------------------- #
# Pure-JAX reference (per-dim loop, identical math) for correctness checking.
# --------------------------------------------------------------------------- #
def slowmaf_ref(x, p, order):
    B, D = x.shape
    z = jnp.zeros_like(x)
    ld = jnp.zeros((B,), jnp.float32)
    for i in range(D):
        h = x @ p["w1"][i] + p["b1"][i]
        h = jnp.where(h >= 0, h, 0.2 * h)
        h = h @ p["w2"][i] + p["b2"][i]
        h = jnp.where(h >= 0, h, 0.2 * h)
        h = h @ p["w3"][i] + p["b3"][i]
        h = jnp.where(h >= 0, h, 0.2 * h)
        st = h @ p["w4"][i] + p["b4"][i]
        s, t = st[:, 0], st[:, 1]
        z = z.at[:, order[i]].set(x[:, i] * jnp.exp(s) + t)
        ld = ld + s
    return z, ld


def make_params(key, dim, nh):
    """Deterministic synthetic parameters matching SlowMAF(dim, parity, nh)."""
    ks = jax.random.split(key, 8)
    w1 = jax.random.normal(ks[0], (dim, dim, nh), jnp.float32) * 0.3
    b1 = jax.random.normal(ks[1], (dim, nh), jnp.float32) * 0.1
    w2 = jax.random.normal(ks[2], (dim, nh, nh), jnp.float32) * 0.3
    b2 = jax.random.normal(ks[3], (dim, nh), jnp.float32) * 0.1
    w3 = jax.random.normal(ks[4], (dim, nh, nh), jnp.float32) * 0.3
    b3 = jax.random.normal(ks[5], (dim, nh), jnp.float32) * 0.1
    w4 = jax.random.normal(ks[6], (dim, nh, 2), jnp.float32) * 0.3
    b4 = jax.random.normal(ks[7], (dim, 2), jnp.float32) * 0.1

    # Net i >= 1 is MLP(i, 2, nh): only the first i input rows of W1 exist.
    row_mask = (jnp.arange(dim)[None, :, None] <
                jnp.arange(dim)[:, None, None]).astype(jnp.float32)   # (D, D, 1)
    w1 = w1 * row_mask

    # Net 0 is LeafParam(2): all-zero network, final bias = p = zeros.
    zero0 = lambda a: a.at[0].set(0.0)
    b1, w2, b2, w3, b3, w4, b4 = map(zero0, (b1, w2, b2, w3, b3, w4, b4))

    return {"w1": w1, "b1": b1, "w2": w2, "b2": b2,
            "w3": w3, "b3": b3, "w4": w4, "b4": b4}


if __name__ == "__main__":
    B, DIM, NH = 8, 4, 24
    PARITY = False
    order = list(range(DIM)) if PARITY else list(range(DIM))[::-1]

    key = jax.random.PRNGKey(0)
    kx, kp = jax.random.split(key)
    x = jax.random.normal(kx, (B, DIM), jnp.float32)
    params = make_params(kp, DIM, NH)

    z_ref_v, ld_ref_v = slowmaf_ref(x, params, order)

    # 1) f32, default grouping (single fused group at this size) -- exact.
    fused_f32 = fuse_params(params)                       # hoisted out of forward
    z1, ld1 = slowmaf_forward(x, order=order, fused=fused_f32)
    jax.block_until_ready((z1, ld1))
    assert jnp.allclose(z1, z_ref_v, atol=1e-5, rtol=1e-5)
    assert jnp.allclose(ld1, ld_ref_v, atol=1e-5, rtol=1e-5)

    # 2) f32, forced multi-group path (grid axis over dim groups) -- exact.
    fused_g2 = fuse_params(params, group_size=2)
    z2, ld2 = slowmaf_forward(x, order=order, fused=fused_g2)
    jax.block_until_ready((z2, ld2))
    assert jnp.allclose(z2, z_ref_v, atol=1e-5, rtol=1e-5)
    assert jnp.allclose(ld2, ld_ref_v, atol=1e-5, rtol=1e-5)

    # 3) bf16 MXU operands (f32 accumulate + f32 elementwise) -- approximate.
    fused_bf16 = fuse_params(params, group_size=2, compute_dtype=jnp.bfloat16)
    z3, ld3 = slowmaf_forward(x, order=order, fused=fused_bf16)
    jax.block_until_ready((z3, ld3))

    def nerr(a, b):
        return float(jnp.max(jnp.abs(a - b) / (1.0 + jnp.abs(b))))

    assert bool(jnp.all(jnp.isfinite(z3))) and bool(jnp.all(jnp.isfinite(ld3)))
    assert nerr(z3, z_ref_v) < 0.2 and nerr(ld3, ld_ref_v) < 0.2

    print("KERNEL_OK")
</pallas_src>

<mosaic_0001>
module attributes {stable_mosaic.version = 11 : i64} {
  func.func @fused_maf_kernel(%arg0: i32, %arg1: i32, %arg2: memref<8x4xf32, #tpu.memory_space<vmem>>, %arg3: memref<1x8x4xf32, #tpu.memory_space<vmem>>, %arg4: memref<1x4x128xf32, #tpu.memory_space<vmem>>, %arg5: memref<1x1x128xf32, #tpu.memory_space<vmem>>, %arg6: memref<1x128x128xf32, #tpu.memory_space<vmem>>, %arg7: memref<1x1x128xf32, #tpu.memory_space<vmem>>, %arg8: memref<1x128x128xf32, #tpu.memory_space<vmem>>, %arg9: memref<1x1x128xf32, #tpu.memory_space<vmem>>, %arg10: memref<1x128x8xf32, #tpu.memory_space<vmem>>, %arg11: memref<1x1x8xf32, #tpu.memory_space<vmem>>, %arg12: memref<1x8x4xf32, #tpu.memory_space<vmem>>, %arg13: memref<8x128xf32, #tpu.memory_space<vmem>>) attributes {dimension_semantics = [#tpu.dimension_semantics<parallel>, #tpu.dimension_semantics<arbitrary>], iteration_bounds = array<i64: 1, 1>, scalar_prefetch = 0 : i64, scratch_operands = 0 : i64, tpu.core_type = #tpu.core_type<tc>, window_params = [{transform_indices = @transform_0, window_bounds = array<i64: 8, 4>}, {transform_indices = @transform_1, window_bounds = array<i64: 1, 8, 4>}, {pipeline_mode = #tpu.pipeline_mode<synchronous>, transform_indices = @transform_2, window_bounds = array<i64: 1, 4, 128>}, {pipeline_mode = #tpu.pipeline_mode<synchronous>, transform_indices = @transform_3, window_bounds = array<i64: 1, 1, 128>}, {pipeline_mode = #tpu.pipeline_mode<synchronous>, transform_indices = @transform_4, window_bounds = array<i64: 1, 128, 128>}, {pipeline_mode = #tpu.pipeline_mode<synchronous>, transform_indices = @transform_5, window_bounds = array<i64: 1, 1, 128>}, {pipeline_mode = #tpu.pipeline_mode<synchronous>, transform_indices = @transform_6, window_bounds = array<i64: 1, 128, 128>}, {pipeline_mode = #tpu.pipeline_mode<synchronous>, transform_indices = @transform_7, window_bounds = array<i64: 1, 1, 128>}, {pipeline_mode = #tpu.pipeline_mode<synchronous>, transform_indices = @transform_8, window_bounds = array<i64: 1, 128, 8>}, {pipeline_mode = #tpu.pipeline_mode<synchronous>, transform_indices = @transform_9, window_bounds = array<i64: 1, 1, 8>}, {transform_indices = @transform_10, window_bounds = array<i64: 1, 8, 4>}, {transform_indices = @transform_11, window_bounds = array<i64: 8, 128>}]} {
    %c0 = arith.constant 0 : index
    %c0_0 = arith.constant 0 : index
    %0 = vector.load %arg2[%c0, %c0_0] : memref<8x4xf32, #tpu.memory_space<vmem>>, vector<8x4xf32>
    %c0_1 = arith.constant 0 : index
    %c0_2 = arith.constant 0 : index
    %c0_3 = arith.constant 0 : index
    %1 = vector.load %arg4[%c0_1, %c0_2, %c0_3] : memref<1x4x128xf32, #tpu.memory_space<vmem>>, vector<1x4x128xf32>
    %2 = vector.shape_cast %1 : vector<1x4x128xf32> to vector<4x128xf32>
    %cst = arith.constant dense<0.000000e+00> : vector<8x128xf32>
    %3 = tpu.matmul %0, %2, %cst {dimension_numbers = #tpu.dot_dimension_numbers<[1], [0], [0], [1], [0, 0, 1, 1], [], []>} : vector<8x4xf32>, vector<4x128xf32>, vector<8x128xf32> -> vector<8x128xf32>
    %c0_4 = arith.constant 0 : index
    %c0_5 = arith.constant 0 : index
    %c0_6 = arith.constant 0 : index
    %4 = vector.load %arg5[%c0_4, %c0_5, %c0_6] : memref<1x1x128xf32, #tpu.memory_space<vmem>>, vector<1x1x128xf32>
    %5 = vector.shape_cast %4 : vector<1x1x128xf32> to vector<1x128xf32>
    %6 = vector.broadcast %5 : vector<1x128xf32> to vector<8x128xf32>
    %7 = arith.addf %3, %6 : vector<8x128xf32>
    %cst_7 = arith.constant 2.000000e-01 : f32
    %8 = vector.broadcast %cst_7 : f32 to vector<8x128xf32>
    %9 = arith.mulf %8, %7 : vector<8x128xf32>
    %10 = arith.maximumf %7, %9 : vector<8x128xf32>
    %c0_8 = arith.constant 0 : index
    %c0_9 = arith.constant 0 : index
    %c0_10 = arith.constant 0 : index
    %11 = vector.load %arg6[%c0_8, %c0_9, %c0_10] : memref<1x128x128xf32, #tpu.memory_space<vmem>>, vector<1x128x128xf32>
    %12 = vector.shape_cast %11 : vector<1x128x128xf32> to vector<128x128xf32>
    %cst_11 = arith.constant dense<0.000000e+00> : vector<8x128xf32>
    %13 = tpu.matmul %10, %12, %cst_11 {dimension_numbers = #tpu.dot_dimension_numbers<[1], [0], [0], [1], [0, 0, 1, 1], [], []>} : vector<8x128xf32>, vector<128x128xf32>, vector<8x128xf32> -> vector<8x128xf32>
    %c0_12 = arith.constant 0 : index
    %c0_13 = arith.constant 0 : index
    %c0_14 = arith.constant 0 : index
    %14 = vector.load %arg7[%c0_12, %c0_13, %c0_14] : memref<1x1x128xf32, #tpu.memory_space<vmem>>, vector<1x1x128xf32>
    %15 = vector.shape_cast %14 : vector<1x1x128xf32> to vector<1x128xf32>
    %16 = vector.broadcast %15 : vector<1x128xf32> to vector<8x128xf32>
    %17 = arith.addf %13, %16 : vector<8x128xf32>
    %cst_15 = arith.constant 2.000000e-01 : f32
    %18 = vector.broadcast %cst_15 : f32 to vector<8x128xf32>
    %19 = arith.mulf %18, %17 : vector<8x128xf32>
    %20 = arith.maximumf %17, %19 : vector<8x128xf32>
    %c0_16 = arith.constant 0 : index
    %c0_17 = arith.constant 0 : index
    %c0_18 = arith.constant 0 : index
    %21 = vector.load %arg8[%c0_16, %c0_17, %c0_18] : memref<1x128x128xf32, #tpu.memory_space<vmem>>, vector<1x128x128xf32>
    %22 = vector.shape_cast %21 : vector<1x128x128xf32> to vector<128x128xf32>
    %cst_19 = arith.constant dense<0.000000e+00> : vector<8x128xf32>
    %23 = tpu.matmul %20, %22, %cst_19 {dimension_numbers = #tpu.dot_dimension_numbers<[1], [0], [0], [1], [0, 0, 1, 1], [], []>} : vector<8x128xf32>, vector<128x128xf32>, vector<8x128xf32> -> vector<8x128xf32>
    %c0_20 = arith.constant 0 : index
    %c0_21 = arith.constant 0 : index
    %c0_22 = arith.constant 0 : index
    %24 = vector.load %arg9[%c0_20, %c0_21, %c0_22] : memref<1x1x128xf32, #tpu.memory_space<vmem>>, vector<1x1x128xf32>
    %25 = vector.shape_cast %24 : vector<1x1x128xf32> to vector<1x128xf32>
    %26 = vector.broadcast %25 : vector<1x128xf32> to vector<8x128xf32>
    %27 = arith.addf %23, %26 : vector<8x128xf32>
    %cst_23 = arith.constant 2.000000e-01 : f32
    %28 = vector.broadcast %cst_23 : f32 to vector<8x128xf32>
    %29 = arith.mulf %28, %27 : vector<8x128xf32>
    %30 = arith.maximumf %27, %29 : vector<8x128xf32>
    %c0_24 = arith.constant 0 : index
    %c0_25 = arith.constant 0 : index
    %c0_26 = arith.constant 0 : index
    %31 = vector.load %arg10[%c0_24, %c0_25, %c0_26] : memref<1x128x8xf32, #tpu.memory_space<vmem>>, vector<1x128x8xf32>
    %32 = vector.shape_cast %31 : vector<1x128x8xf32> to vector<128x8xf32>
    %cst_27 = arith.constant dense<0.000000e+00> : vector<8x8xf32>
    %33 = tpu.matmul %30, %32, %cst_27 {dimension_numbers = #tpu.dot_dimension_numbers<[1], [0], [0], [1], [0, 0, 1, 1], [], []>} : vector<8x128xf32>, vector<128x8xf32>, vector<8x8xf32> -> vector<8x8xf32>
    %c0_28 = arith.constant 0 : index
    %c0_29 = arith.constant 0 : index
    %c0_30 = arith.constant 0 : index
    %34 = vector.load %arg11[%c0_28, %c0_29, %c0_30] : memref<1x1x8xf32, #tpu.memory_space<vmem>>, vector<1x1x8xf32>
    %35 = vector.shape_cast %34 : vector<1x1x8xf32> to vector<1x8xf32>
    %36 = vector.broadcast %35 : vector<1x8xf32> to vector<8x8xf32>
    %37 = arith.addf %33, %36 : vector<8x8xf32>
    %38 = vector.extract_strided_slice %37 {offsets = [0, 0], sizes = [8, 4], strides = [1, 1]} : vector<8x8xf32> to vector<8x4xf32>
    %39 = vector.extract_strided_slice %37 {offsets = [0, 4], sizes = [8, 4], strides = [1, 1]} : vector<8x8xf32> to vector<8x4xf32>
    %c0_31 = arith.constant 0 : index
    %c0_32 = arith.constant 0 : index
    %c0_33 = arith.constant 0 : index
    %40 = vector.load %arg3[%c0_31, %c0_32, %c0_33] : memref<1x8x4xf32, #tpu.memory_space<vmem>>, vector<1x8x4xf32>
    %41 = vector.shape_cast %40 : vector<1x8x4xf32> to vector<8x4xf32>
    %42 = math.exp %38 : vector<8x4xf32>
    %43 = arith.mulf %41, %42 : vector<8x4xf32>
    %44 = arith.addf %43, %39 : vector<8x4xf32>
    %c0_34 = arith.constant 0 : index
    %c0_35 = arith.constant 0 : index
    %c0_36 = arith.constant 0 : index
    %45 = vector.load %arg12[%c0_34, %c0_35, %c0_36] : memref<1x8x4xf32, #tpu.memory_space<vmem>>, vector<1x8x4xf32>
    %46 = vector.shape_cast %45 : vector<1x8x4xf32> to vector<8x4xf32>
    %47 = vector.shape_cast %44 : vector<8x4xf32> to vector<1x8x4xf32>
    tpu.vector_store %arg12[%c0_34, %c0_35, %c0_36], %47 {strides = array<i32>} : memref<1x8x4xf32, #tpu.memory_space<vmem>>, vector<1x8x4xf32>,
    %cst_37 = arith.constant dense<0.000000e+00> : vector<8xf32>
    %48 = vector.multi_reduction <add>, %38, %cst_37 [1] : vector<8x4xf32> to vector<8xf32>
    %49 = vector.shape_cast %48 : vector<8xf32> to vector<8x1xf32>
    %50 = vector.shape_cast %49 : vector<8x1xf32> to vector<8x1xf32>
    %51 = vector.broadcast %50 : vector<8x1xf32> to vector<8x128xf32>
    %c0_i32 = arith.constant 0 : i32
    %52 = arith.cmpi eq, %arg1, %c0_i32 : i32
    %53 = arith.extui %52 : i1 to i32
    %c0_i32_38 = arith.constant 0 : i32
    %54 = arith.cmpi ne, %53, %c0_i32_38 : i32
    scf.if %54 {
      %c0_41 = arith.constant 0 : index
      %c0_42 = arith.constant 0 : index
      %58 = vector.load %arg13[%c0_41, %c0_42] : memref<8x128xf32, #tpu.memory_space<vmem>>, vector<8x128xf32>
      tpu.vector_store %arg13[%c0_41, %c0_42], %51 {strides = array<i32>} : memref<8x128xf32, #tpu.memory_space<vmem>>, vector<8x128xf32>,
    } else {
    }
    %c0_i32_39 = arith.constant 0 : i32
    %55 = arith.cmpi sgt, %arg1, %c0_i32_39 : i32
    %56 = arith.extui %55 : i1 to i32
    %c0_i32_40 = arith.constant 0 : i32
    %57 = arith.cmpi ne, %56, %c0_i32_40 : i32
    scf.if %57 {
      %c0_41 = arith.constant 0 : index
      %c0_42 = arith.constant 0 : index
      %58 = vector.load %arg13[%c0_41, %c0_42] : memref<8x128xf32, #tpu.memory_space<vmem>>, vector<8x128xf32>
      %59 = arith.addf %58, %51 : vector<8x128xf32>
      %c0_43 = arith.constant 0 : index
      %c0_44 = arith.constant 0 : index
      %60 = vector.load %arg13[%c0_43, %c0_44] : memref<8x128xf32, #tpu.memory_space<vmem>>, vector<8x128xf32>
      tpu.vector_store %arg13[%c0_43, %c0_44], %59 {strides = array<i32>} : memref<8x128xf32, #tpu.memory_space<vmem>>, vector<8x128xf32>,
    } else {
    }
    return
  }
  func.func @transform_0(%arg0: i32, %arg1: i32) -> (i32, i32) {
    %c0_i32 = arith.constant 0 : i32
    %c0_i32_0 = arith.constant 0 : i32
    return %arg0, %c0_i32 : i32, i32
  }
  func.func @transform_1(%arg0: i32, %arg1: i32) -> (i32, i32, i32) {
    %c0_i32 = arith.constant 0 : i32
    %c0_i32_0 = arith.constant 0 : i32
    return %arg1, %arg0, %c0_i32 : i32, i32, i32
  }
  func.func @transform_2(%arg0: i32, %arg1: i32) -> (i32, i32, i32) {
    %c0_i32 = arith.constant 0 : i32
    %c0_i32_0 = arith.constant 0 : i32
    %c0_i32_1 = arith.constant 0 : i32
    return %arg1, %c0_i32, %c0_i32_0 : i32, i32, i32
  }
  func.func @transform_3(%arg0: i32, %arg1: i32) -> (i32, i32, i32) {
    %c0_i32 = arith.constant 0 : i32
    %c0_i32_0 = arith.constant 0 : i32
    %c0_i32_1 = arith.constant 0 : i32
    return %arg1, %c0_i32, %c0_i32_0 : i32, i32, i32
  }
  func.func @transform_4(%arg0: i32, %arg1: i32) -> (i32, i32, i32) {
    %c0_i32 = arith.constant 0 : i32
    %c0_i32_0 = arith.constant 0 : i32
    %c0_i32_1 = arith.constant 0 : i32
    return %arg1, %c0_i32, %c0_i32_0 : i32, i32, i32
  }
  func.func @transform_5(%arg0: i32, %arg1: i32) -> (i32, i32, i32) {
    %c0_i32 = arith.constant 0 : i32
    %c0_i32_0 = arith.constant 0 : i32
    %c0_i32_1 = arith.constant 0 : i32
    return %arg1, %c0_i32, %c0_i32_0 : i32, i32, i32
  }
  func.func @transform_6(%arg0: i32, %arg1: i32) -> (i32, i32, i32) {
    %c0_i32 = arith.constant 0 : i32
    %c0_i32_0 = arith.constant 0 : i32
    %c0_i32_1 = arith.constant 0 : i32
    return %arg1, %c0_i32, %c0_i32_0 : i32, i32, i32
  }
  func.func @transform_7(%arg0: i32, %arg1: i32) -> (i32, i32, i32) {
    %c0_i32 = arith.constant 0 : i32
    %c0_i32_0 = arith.constant 0 : i32
    %c0_i32_1 = arith.constant 0 : i32
    return %arg1, %c0_i32, %c0_i32_0 : i32, i32, i32
  }
  func.func @transform_8(%arg0: i32, %arg1: i32) -> (i32, i32, i32) {
    %c0_i32 = arith.constant 0 : i32
    %c0_i32_0 = arith.constant 0 : i32
    %c0_i32_1 = arith.constant 0 : i32
    return %arg1, %c0_i32, %c0_i32_0 : i32, i32, i32
  }
  func.func @transform_9(%arg0: i32, %arg1: i32) -> (i32, i32, i32) {
    %c0_i32 = arith.constant 0 : i32
    %c0_i32_0 = arith.constant 0 : i32
    %c0_i32_1 = arith.constant 0 : i32
    return %arg1, %c0_i32, %c0_i32_0 : i32, i32, i32
  }
  func.func @transform_10(%arg0: i32, %arg1: i32) -> (i32, i32, i32) {
    %c0_i32 = arith.constant 0 : i32
    %c0_i32_0 = arith.constant 0 : i32
    return %arg1, %arg0, %c0_i32 : i32, i32, i32
  }
  func.func @transform_11(%arg0: i32, %arg1: i32) -> (i32, i32) {
    %c0_i32 = arith.constant 0 : i32
    %c0_i32_0 = arith.constant 0 : i32
    return %arg0, %c0_i32 : i32, i32
  }
}

module attributes {stable_mosaic.version = 11 : i64} {
  func.func @fused_maf_kernel(%arg0: i32, %arg1: i32, %arg2: memref<8x4xf32, #tpu.memory_space<vmem>>, %arg3: memref<1x8x4xf32, #tpu.memory_space<vmem>>, %arg4: memref<1x4x128xf32, #tpu.memory_space<vmem>>, %arg5: memref<1x1x128xf32, #tpu.memory_space<vmem>>, %arg6: memref<1x128x128xf32, #tpu.memory_space<vmem>>, %arg7: memref<1x1x128xf32, #tpu.memory_space<vmem>>, %arg8: memref<1x128x128xf32, #tpu.memory_space<vmem>>, %arg9: memref<1x1x128xf32, #tpu.memory_space<vmem>>, %arg10: memref<1x128x8xf32, #tpu.memory_space<vmem>>, %arg11: memref<1x1x8xf32, #tpu.memory_space<vmem>>, %arg12: memref<1x8x4xf32, #tpu.memory_space<vmem>>, %arg13: memref<8x128xf32, #tpu.memory_space<vmem>>) attributes {dimension_semantics = [#tpu.dimension_semantics<parallel>, #tpu.dimension_semantics<arbitrary>], iteration_bounds = array<i64: 1, 1>, scalar_prefetch = 0 : i64, scratch_operands = 0 : i64, tpu.core_type = #tpu.core_type<tc>, window_params = [{transform_indices = @transform_0, window_bounds = array<i64: 8, 4>}, {transform_indices = @transform_1, window_bounds = array<i64: 1, 8, 4>}, {transform_indices = @transform_2, window_bounds = array<i64: 1, 4, 128>}, {transform_indices = @transform_3, window_bounds = array<i64: 1, 1, 128>}, {transform_indices = @transform_4, window_bounds = array<i64: 1, 128, 128>}, {transform_indices = @transform_5, window_bounds = array<i64: 1, 1, 128>}, {transform_indices = @transform_6, window_bounds = array<i64: 1, 128, 128>}, {transform_indices = @transform_7, window_bounds = array<i64: 1, 1, 128>}, {transform_indices = @transform_8, window_bounds = array<i64: 1, 128, 8>}, {transform_indices = @transform_9, window_bounds = array<i64: 1, 1, 8>}, {transform_indices = @transform_10, window_bounds = array<i64: 1, 8, 4>}, {transform_indices = @transform_11, window_bounds = array<i64: 8, 128>}]} {
    %c0 = arith.constant 0 : index
    %c0_0 = arith.constant 0 : index
    %0 = vector.load %arg2[%c0, %c0_0] : memref<8x4xf32, #tpu.memory_space<vmem>>, vector<8x4xf32>
    %c0_1 = arith.constant 0 : index
    %c0_2 = arith.constant 0 : index
    %c0_3 = arith.constant 0 : index
    %1 = vector.load %arg4[%c0_1, %c0_2, %c0_3] : memref<1x4x128xf32, #tpu.memory_space<vmem>>, vector<1x4x128xf32>
    %2 = vector.shape_cast %1 : vector<1x4x128xf32> to vector<4x128xf32>
    %cst = arith.constant dense<0.000000e+00> : vector<8x128xf32>
    %3 = tpu.matmul %0, %2, %cst {dimension_numbers = #tpu.dot_dimension_numbers<[1], [0], [0], [1], [0, 0, 1, 1], [], []>} : vector<8x4xf32>, vector<4x128xf32>, vector<8x128xf32> -> vector<8x128xf32>
    %c0_4 = arith.constant 0 : index
    %c0_5 = arith.constant 0 : index
    %c0_6 = arith.constant 0 : index
    %4 = vector.load %arg5[%c0_4, %c0_5, %c0_6] : memref<1x1x128xf32, #tpu.memory_space<vmem>>, vector<1x1x128xf32>
    %5 = vector.shape_cast %4 : vector<1x1x128xf32> to vector<1x128xf32>
    %6 = vector.broadcast %5 : vector<1x128xf32> to vector<8x128xf32>
    %7 = arith.addf %3, %6 : vector<8x128xf32>
    %cst_7 = arith.constant 2.000000e-01 : f32
    %8 = vector.broadcast %cst_7 : f32 to vector<8x128xf32>
    %9 = arith.mulf %8, %7 : vector<8x128xf32>
    %10 = arith.maximumf %7, %9 : vector<8x128xf32>
    %c0_8 = arith.constant 0 : index
    %c0_9 = arith.constant 0 : index
    %c0_10 = arith.constant 0 : index
    %11 = vector.load %arg6[%c0_8, %c0_9, %c0_10] : memref<1x128x128xf32, #tpu.memory_space<vmem>>, vector<1x128x128xf32>
    %12 = vector.shape_cast %11 : vector<1x128x128xf32> to vector<128x128xf32>
    %cst_11 = arith.constant dense<0.000000e+00> : vector<8x128xf32>
    %13 = tpu.matmul %10, %12, %cst_11 {dimension_numbers = #tpu.dot_dimension_numbers<[1], [0], [0], [1], [0, 0, 1, 1], [], []>} : vector<8x128xf32>, vector<128x128xf32>, vector<8x128xf32> -> vector<8x128xf32>
    %c0_12 = arith.constant 0 : index
    %c0_13 = arith.constant 0 : index
    %c0_14 = arith.constant 0 : index
    %14 = vector.load %arg7[%c0_12, %c0_13, %c0_14] : memref<1x1x128xf32, #tpu.memory_space<vmem>>, vector<1x1x128xf32>
    %15 = vector.shape_cast %14 : vector<1x1x128xf32> to vector<1x128xf32>
    %16 = vector.broadcast %15 : vector<1x128xf32> to vector<8x128xf32>
    %17 = arith.addf %13, %16 : vector<8x128xf32>
    %cst_15 = arith.constant 2.000000e-01 : f32
    %18 = vector.broadcast %cst_15 : f32 to vector<8x128xf32>
    %19 = arith.mulf %18, %17 : vector<8x128xf32>
    %20 = arith.maximumf %17, %19 : vector<8x128xf32>
    %c0_16 = arith.constant 0 : index
    %c0_17 = arith.constant 0 : index
    %c0_18 = arith.constant 0 : index
    %21 = vector.load %arg8[%c0_16, %c0_17, %c0_18] : memref<1x128x128xf32, #tpu.memory_space<vmem>>, vector<1x128x128xf32>
    %22 = vector.shape_cast %21 : vector<1x128x128xf32> to vector<128x128xf32>
    %cst_19 = arith.constant dense<0.000000e+00> : vector<8x128xf32>
    %23 = tpu.matmul %20, %22, %cst_19 {dimension_numbers = #tpu.dot_dimension_numbers<[1], [0], [0], [1], [0, 0, 1, 1], [], []>} : vector<8x128xf32>, vector<128x128xf32>, vector<8x128xf32> -> vector<8x128xf32>
    %c0_20 = arith.constant 0 : index
    %c0_21 = arith.constant 0 : index
    %c0_22 = arith.constant 0 : index
    %24 = vector.load %arg9[%c0_20, %c0_21, %c0_22] : memref<1x1x128xf32, #tpu.memory_space<vmem>>, vector<1x1x128xf32>
    %25 = vector.shape_cast %24 : vector<1x1x128xf32> to vector<1x128xf32>
    %26 = vector.broadcast %25 : vector<1x128xf32> to vector<8x128xf32>
    %27 = arith.addf %23, %26 : vector<8x128xf32>
    %cst_23 = arith.constant 2.000000e-01 : f32
    %28 = vector.broadcast %cst_23 : f32 to vector<8x128xf32>
    %29 = arith.mulf %28, %27 : vector<8x128xf32>
    %30 = arith.maximumf %27, %29 : vector<8x128xf32>
    %c0_24 = arith.constant 0 : index
    %c0_25 = arith.constant 0 : index
    %c0_26 = arith.constant 0 : index
    %31 = vector.load %arg10[%c0_24, %c0_25, %c0_26] : memref<1x128x8xf32, #tpu.memory_space<vmem>>, vector<1x128x8xf32>
    %32 = vector.shape_cast %31 : vector<1x128x8xf32> to vector<128x8xf32>
    %cst_27 = arith.constant dense<0.000000e+00> : vector<8x8xf32>
    %33 = tpu.matmul %30, %32, %cst_27 {dimension_numbers = #tpu.dot_dimension_numbers<[1], [0], [0], [1], [0, 0, 1, 1], [], []>} : vector<8x128xf32>, vector<128x8xf32>, vector<8x8xf32> -> vector<8x8xf32>
    %c0_28 = arith.constant 0 : index
    %c0_29 = arith.constant 0 : index
    %c0_30 = arith.constant 0 : index
    %34 = vector.load %arg11[%c0_28, %c0_29, %c0_30] : memref<1x1x8xf32, #tpu.memory_space<vmem>>, vector<1x1x8xf32>
    %35 = vector.shape_cast %34 : vector<1x1x8xf32> to vector<1x8xf32>
    %36 = vector.broadcast %35 : vector<1x8xf32> to vector<8x8xf32>
    %37 = arith.addf %33, %36 : vector<8x8xf32>
    %38 = vector.extract_strided_slice %37 {offsets = [0, 0], sizes = [8, 4], strides = [1, 1]} : vector<8x8xf32> to vector<8x4xf32>
    %39 = vector.extract_strided_slice %37 {offsets = [0, 4], sizes = [8, 4], strides = [1, 1]} : vector<8x8xf32> to vector<8x4xf32>
    %c0_31 = arith.constant 0 : index
    %c0_32 = arith.constant 0 : index
    %c0_33 = arith.constant 0 : index
    %40 = vector.load %arg3[%c0_31, %c0_32, %c0_33] : memref<1x8x4xf32, #tpu.memory_space<vmem>>, vector<1x8x4xf32>
    %41 = vector.shape_cast %40 : vector<1x8x4xf32> to vector<8x4xf32>
    %42 = math.exp %38 : vector<8x4xf32>
    %43 = arith.mulf %41, %42 : vector<8x4xf32>
    %44 = arith.addf %43, %39 : vector<8x4xf32>
    %c0_34 = arith.constant 0 : index
    %c0_35 = arith.constant 0 : index
    %c0_36 = arith.constant 0 : index
    %45 = vector.load %arg12[%c0_34, %c0_35, %c0_36] : memref<1x8x4xf32, #tpu.memory_space<vmem>>, vector<1x8x4xf32>
    %46 = vector.shape_cast %45 : vector<1x8x4xf32> to vector<8x4xf32>
    %47 = vector.shape_cast %44 : vector<8x4xf32> to vector<1x8x4xf32>
    tpu.vector_store %arg12[%c0_34, %c0_35, %c0_36], %47 {strides = array<i32>} : memref<1x8x4xf32, #tpu.memory_space<vmem>>, vector<1x8x4xf32>,
    %cst_37 = arith.constant dense<0.000000e+00> : vector<8xf32>
    %48 = vector.multi_reduction <add>, %38, %cst_37 [1] : vector<8x4xf32> to vector<8xf32>
    %49 = vector.shape_cast %48 : vector<8xf32> to vector<8x1xf32>
    %50 = vector.shape_cast %49 : vector<8x1xf32> to vector<8x1xf32>
    %51 = vector.broadcast %50 : vector<8x1xf32> to vector<8x128xf32>
    %c0_i32 = arith.constant 0 : i32
    %52 = arith.cmpi eq, %arg1, %c0_i32 : i32
    %53 = arith.extui %52 : i1 to i32
    %c0_i32_38 = arith.constant 0 : i32
    %54 = arith.cmpi ne, %53, %c0_i32_38 : i32
    scf.if %54 {
      %c0_41 = arith.constant 0 : index
      %c0_42 = arith.constant 0 : index
      %58 = vector.load %arg13[%c0_41, %c0_42] : memref<8x128xf32, #tpu.memory_space<vmem>>, vector<8x128xf32>
      tpu.vector_store %arg13[%c0_41, %c0_42], %51 {strides = array<i32>} : memref<8x128xf32, #tpu.memory_space<vmem>>, vector<8x128xf32>,
    } else {
    }
    %c0_i32_39 = arith.constant 0 : i32
    %55 = arith.cmpi sgt, %arg1, %c0_i32_39 : i32
    %56 = arith.extui %55 : i1 to i32
    %c0_i32_40 = arith.constant 0 : i32
    %57 = arith.cmpi ne, %56, %c0_i32_40 : i32
    scf.if %57 {
      %c0_41 = arith.constant 0 : index
      %c0_42 = arith.constant 0 : index
      %58 = vector.load %arg13[%c0_41, %c0_42] : memref<8x128xf32, #tpu.memory_space<vmem>>, vector<8x128xf32>
      %59 = arith.addf %58, %51 : vector<8x128xf32>
      %c0_43 = arith.constant 0 : index
      %c0_44 = arith.constant 0 : index
      %60 = vector.load %arg13[%c0_43, %c0_44] : memref<8x128xf32, #tpu.memory_space<vmem>>, vector<8x128xf32>
      tpu.vector_store %arg13[%c0_43, %c0_44], %59 {strides = array<i32>} : memref<8x128xf32, #tpu.memory_space<vmem>>, vector<8x128xf32>,
    } else {
    }
    return
  }
  func.func @transform_0(%arg0: i32, %arg1: i32) -> (i32, i32) {
    %c0_i32 = arith.constant 0 : i32
    %c0_i32_0 = arith.constant 0 : i32
    return %arg0, %c0_i32 : i32, i32
  }
  func.func @transform_1(%arg0: i32, %arg1: i32) -> (i32, i32, i32) {
    %c0_i32 = arith.constant 0 : i32
    %c0_i32_0 = arith.constant 0 : i32
    return %arg1, %arg0, %c0_i32 : i32, i32, i32
  }
  func.func @transform_2(%arg0: i32, %arg1: i32) -> (i32, i32, i32) {
    %c0_i32 = arith.constant 0 : i32
    %c0_i32_0 = arith.constant 0 : i32
    %c0_i32_1 = arith.constant 0 : i32
    return %arg1, %c0_i32, %c0_i32_0 : i32, i32, i32
  }
  func.func @transform_3(%arg0: i32, %arg1: i32) -> (i32, i32, i32) {
    %c0_i32 = arith.constant 0 : i32
    %c0_i32_0 = arith.constant 0 : i32
    %c0_i32_1 = arith.constant 0 : i32
    return %arg1, %c0_i32, %c0_i32_0 : i32, i32, i32
  }
  func.func @transform_4(%arg0: i32, %arg1: i32) -> (i32, i32, i32) {
    %c0_i32 = arith.constant 0 : i32
    %c0_i32_0 = arith.constant 0 : i32
    %c0_i32_1 = arith.constant 0 : i32
    return %arg1, %c0_i32, %c0_i32_0 : i32, i32, i32
  }
  func.func @transform_5(%arg0: i32, %arg1: i32) -> (i32, i32, i32) {
    %c0_i32 = arith.constant 0 : i32
    %c0_i32_0 = arith.constant 0 : i32
    %c0_i32_1 = arith.constant 0 : i32
    return %arg1, %c0_i32, %c0_i32_0 : i32, i32, i32
  }
  func.func @transform_6(%arg0: i32, %arg1: i32) -> (i32, i32, i32) {
    %c0_i32 = arith.constant 0 : i32
    %c0_i32_0 = arith.constant 0 : i32
    %c0_i32_1 = arith.constant 0 : i32
    return %arg1, %c0_i32, %c0_i32_0 : i32, i32, i32
  }
  func.func @transform_7(%arg0: i32, %arg1: i32) -> (i32, i32, i32) {
    %c0_i32 = arith.constant 0 : i32
    %c0_i32_0 = arith.constant 0 : i32
    %c0_i32_1 = arith.constant 0 : i32
    return %arg1, %c0_i32, %c0_i32_0 : i32, i32, i32
  }
  func.func @transform_8(%arg0: i32, %arg1: i32) -> (i32, i32, i32) {
    %c0_i32 = arith.constant 0 : i32
    %c0_i32_0 = arith.constant 0 : i32
    %c0_i32_1 = arith.constant 0 : i32
    return %arg1, %c0_i32, %c0_i32_0 : i32, i32, i32
  }
  func.func @transform_9(%arg0: i32, %arg1: i32) -> (i32, i32, i32) {
    %c0_i32 = arith.constant 0 : i32
    %c0_i32_0 = arith.constant 0 : i32
    %c0_i32_1 = arith.constant 0 : i32
    return %arg1, %c0_i32, %c0_i32_0 : i32, i32, i32
  }
  func.func @transform_10(%arg0: i32, %arg1: i32) -> (i32, i32, i32) {
    %c0_i32 = arith.constant 0 : i32
    %c0_i32_0 = arith.constant 0 : i32
    return %arg1, %arg0, %c0_i32 : i32, i32, i32
  }
  func.func @transform_11(%arg0: i32, %arg1: i32) -> (i32, i32) {
    %c0_i32 = arith.constant 0 : i32
    %c0_i32_0 = arith.constant 0 : i32
    return %arg0, %c0_i32 : i32, i32
  }
}

</mosaic_0001>

<llo_original>
// kernel: tpu_custom_call.1
$region0: #{tpu_custom_call.1}
  #allocation0 [shape = 'u32[]', space=smem, size = 0x4, offset = 0x4, fixed_abs, tag = 'smem constant byte address 0x4 - core index']
  #allocation1 [shape = 'u32[144,128]{1,0:T(1,128)}', space=vmem, size = 0x12000, scoped, tag = 'internal scratch']
  %s0 = inlined_call_operand.vmem [shape: f32[8,4], index: 0, kind: input, shape index: {}]
  %s1 = inlined_call_operand.vmem [shape: f32[1,8,4], index: 1, kind: input, shape index: {}]
  %s2 = inlined_call_operand.vmem [shape: f32[1,4,128], index: 2, kind: input, shape index: {}]
  %s3 = inlined_call_operand.vmem [shape: f32[1,1,128], index: 3, kind: input, shape index: {}]
  %s4 = inlined_call_operand.vmem [shape: f32[1,128,128], index: 4, kind: input, shape index: {}]
  %s5 = inlined_call_operand.vmem [shape: f32[1,1,128], index: 5, kind: input, shape index: {}]
  %s6 = inlined_call_operand.hbm [shape: f32[1,128,128], index: 6, kind: input, shape index: {}]
  %s7 = inlined_call_operand.vmem [shape: f32[1,1,128], index: 7, kind: input, shape index: {}]
  %s8 = inlined_call_operand.vmem [shape: f32[1,128,8], index: 8, kind: input, shape index: {}]
  %s9 = inlined_call_operand.vmem [shape: f32[1,1,8], index: 9, kind: input, shape index: {}]
  %s10 = inlined_call_operand.vmem [shape: f32[1,8,4], index: 10, kind: output, shape index: {0}]
  %s11 = inlined_call_operand.hbm [shape: f32[8,128], index: 11, kind: output, shape index: {1}]
  %12 = xla_tuple %s10, %s11
  %s13 = sld [smem:[#allocation0]]
  $region70: #{tpu_custom_call.1} parent=0
    _
  %s15 = ssub.s32 1, %s13
  %s16 = scalar_select 0, %s15, %s13
  $region1: #{tpu_custom_call.1} parent=0
    #allocation2 [shape = 'u8[65536]{0}', space=vmem, size = 0x10000, scoped, tag = 'input window, operand 6, single buffered']
    #allocation3 [shape = 's32[1]{0}', space=sflag, size = 0x4, scoped, tag = 'scoped memory for tpu_custom_call.1']
    #allocation4 [shape = 's32[1]{0}', space=sflag, size = 0x4, scoped, tag = 'scoped memory for tpu_custom_call.1']
    #allocation5 [shape = 'u8[4096]{0}', space=vmem, size = 0x1000, scoped, tag = 'output window, operand 1, single buffered']
    %17 = vsyncpa [#allocation3], 0
    %18 = vsyncpa [#allocation4], 0
    // Predicated region
    $region2: #{tpu_custom_call.1} parent=1 // pred_check
      _
    $region3: #{tpu_custom_call.1} parent=1 // pred_check_branch
      %20 = sbr.rel (0) target = $region5
    $region4: #{tpu_custom_call.1} parent=1 // pred_region
      _
    $region5: #{tpu_custom_call.1} parent=1 // pred_fallthru
      _
    // Predicated region
    $region6: #{tpu_custom_call.1} parent=1 // pred_check
      _
    $region7: #{tpu_custom_call.1} parent=1 // pred_check_branch
      %22 = sbr.rel (0) target = $region9
    $region8: #{tpu_custom_call.1} parent=1 // pred_region
      _
    $region9: #{tpu_custom_call.1} parent=1 // pred_fallthru
      _
    // Predicated region
    $region10: #{tpu_custom_call.1} parent=1 // pred_check
      _
    $region11: #{tpu_custom_call.1} parent=1 // pred_check_branch
      %24 = sbr.rel (0) target = $region13
    $region12: #{tpu_custom_call.1} parent=1 // pred_region
      _
    $region13: #{tpu_custom_call.1} parent=1 // pred_fallthru
      _
    // Predicated region
    $region14: #{tpu_custom_call.1} parent=1 // pred_check
      _
    $region15: #{tpu_custom_call.1} parent=1 // pred_check_branch
      %26 = sbr.rel (0) target = $region17
    $region16: #{tpu_custom_call.1} parent=1 // pred_region
      _
    $region17: #{tpu_custom_call.1} parent=1 // pred_fallthru
      _
    // Predicated region
    $region18: #{tpu_custom_call.1} parent=1 // pred_check
      _
    $region19: #{tpu_custom_call.1} parent=1 // pred_check_branch
      %28 = sbr.rel (0) target = $region21
    $region20: #{tpu_custom_call.1} parent=1 // pred_region
      _
    $region21: #{tpu_custom_call.1} parent=1 // pred_fallthru
      _
    // Predicated region
    $region22: #{tpu_custom_call.1} parent=1 // pred_check
      _
    $region23: #{tpu_custom_call.1} parent=1 // pred_check_branch
      %30 = sbr.rel (0) target = $region25
    $region24: #{tpu_custom_call.1} parent=1 // pred_region
      _
    $region25: #{tpu_custom_call.1} parent=1 // pred_fallthru
      _
    // Predicated region
    $region26: #{tpu_custom_call.1} parent=1 // pred_check
      _
    $region27: #{tpu_custom_call.1} parent=1 // pred_check_branch
      %32 = sbr.rel (0) target = $region29
    $region28: #{tpu_custom_call.1} parent=1 // pred_region
      %s34 = ssub.s32 2048, 2048
      %35 = vsyncadd [#allocation3], %s34
      %s36 = sshll.u32 [#allocation2], 4
      %s37 = int_to_ptr.vmem [resolvable:$true] %s36
      %42 = dma.hbm_to_vmem [thread:$0]  %s6, 2048, %s37, [#allocation3], 128, 128, 8
    $region29: #{tpu_custom_call.1} parent=1 // pred_fallthru
      _
    // Predicated region
    $region30: #{tpu_custom_call.1} parent=1 // pred_check
      _
    $region31: #{tpu_custom_call.1} parent=1 // pred_check_branch
      %44 = sbr.rel (0) target = $region33
    $region32: #{tpu_custom_call.1} parent=1 // pred_region
      _
    $region33: #{tpu_custom_call.1} parent=1 // pred_fallthru
      _
    // Predicated region
    $region34: #{tpu_custom_call.1} parent=1 // pred_check
      _
    $region35: #{tpu_custom_call.1} parent=1 // pred_check_branch
      %46 = sbr.rel (0) target = $region37
    $region36: #{tpu_custom_call.1} parent=1 // pred_region
      _
    $region37: #{tpu_custom_call.1} parent=1 // pred_fallthru
      _
    // Predicated region
    $region38: #{tpu_custom_call.1} parent=1 // pred_check
      _
    $region39: #{tpu_custom_call.1} parent=1 // pred_check_branch
      %48 = sbr.rel (0) target = $region41
    $region40: #{tpu_custom_call.1} parent=1 // pred_region
      _
    $region41: #{tpu_custom_call.1} parent=1 // pred_fallthru
      _
    // Predicated region
    $region42: #{tpu_custom_call.1} parent=1 // pred_check
      _
    $region43: #{tpu_custom_call.1} parent=1 // pred_check_branch
      %50 = sbr.rel (0) target = $region45
    $region44: #{tpu_custom_call.1} parent=1 // pred_region
      %51 = dma.done [#allocation3], 2048
    $region45: #{tpu_custom_call.1} parent=1 // pred_fallthru
      _
    %v52 = vld [vmem:[%s0] sm:$0xff]
    %v53 = vld [vmem:[%s2] sm:$0xf]
    %v54 = vld [vmem:[%s3] sm:$0x1]
    %v56 = vlaneseq
    %v57 = vshrl.u32 %v56, 7
    %v58 = vsub.s32 0, %v57
    %v59 = vrot.slane %v54, %v58
    %vm61 = vcmask 31744
    %v63 = vsel %vm61, %v52, 0
    %vm65 = vcmask 1043456
    %v67 = vsel %vm65, %v53, 0
    %69 = vmatprep.subr.mxu0 0.0
    %70 = vmatpush1.msra.mxu0 %v67
    %71 = vmatprep.subr.mxu0 0.0
    %72 = vmatpush1.msra.mxu0 0.0
    %73 = vmatprep.subr.mxu0 0.0
    %74 = vmatpush1.msra.mxu0 0.0
    %75 = vmatprep.subr.mxu0 0.0
    %76 = vmatpush1.msra.mxu0 0.0
    %77 = vmatprep.subr.mxu0 0.0
    %78 = vmatpush1.msra.mxu0 0.0
    %79 = vmatprep.subr.mxu0 0.0
    %80 = vmatpush1.msra.mxu0 0.0
    %81 = vmatprep.subr.mxu0 0.0
    %82 = vmatpush1.msra.mxu0 0.0
    %83 = vmatprep.subr.mxu0 0.0
    %84 = vmatpush1.msra.mxu0 0.0
    %85 = vmatprep.subr.mxu0 0.0
    %86 = vmatpush1.msra.mxu0 0.0
    %87 = vmatprep.subr.mxu0 0.0
    %88 = vmatpush1.msra.mxu0 0.0
    %89 = vmatprep.subr.mxu0 0.0
    %90 = vmatpush1.msra.mxu0 0.0
    %91 = vmatprep.subr.mxu0 0.0
    %92 = vmatpush1.msra.mxu0 0.0
    %93 = vmatprep.subr.mxu0 0.0
    %94 = vmatpush1.msra.mxu0 0.0
    %95 = vmatprep.subr.mxu0 0.0
    %96 = vmatpush1.msra.mxu0 0.0
    %97 = vmatprep.subr.mxu0 0.0
    %98 = vmatpush1.msra.mxu0 0.0
    %99 = vmatprep.subr.mxu0 0.0
    %100 = vmatpush1.msra.mxu0 0.0
    %101 = vmatprep.subr.mxu0 0.0
    %102 = vmatpush1.msra.mxu0 0.0
    %103 = vmatprep.subr.mxu0 0.0
    %104 = vmatpush1.msra.mxu0 0.0
    %105 = vmatprep.subr.mxu0 0.0
    %106 = vmatpush1.msra.mxu0 0.0
    %107 = vmatprep.subr.mxu0 0.0
    %108 = vmatpush1.msra.mxu0 0.0
    %109 = vmatprep.subr.mxu0 0.0
    %110 = vmatpush1.msra.mxu0 0.0
    %111 = vmatprep.subr.mxu0 0.0
    %112 = vmatpush1.msra.mxu0 0.0
    %113 = vmatprep.subr.mxu0 0.0
    %114 = vmatpush1.msra.mxu0 0.0
    %115 = vmatprep.subr.mxu0 0.0
    %116 = vmatpush1.msra.mxu0 0.0
    %117 = vmatprep.subr.mxu0 0.0
    %118 = vmatpush1.msra.mxu0 0.0
    %119 = vmatprep.subr.mxu0 0.0
    %120 = vmatpush1.msra.mxu0 0.0
    %121 = vmatprep.subr.mxu0 0.0
    %122 = vmatpush1.msra.mxu0 0.0
    %123 = vmatprep.subr.mxu0 0.0
    %124 = vmatpush1.msra.mxu0 0.0
    %125 = vmatprep.subr.mxu0 0.0
    %126 = vmatpush1.msra.mxu0 0.0
    %127 = vmatprep.subr.mxu0 0.0
    %128 = vmatpush1.msra.mxu0 0.0
    %129 = vmatprep.subr.mxu0 0.0
    %130 = vmatpush1.msra.mxu0 0.0
    %131 = vmatprep.subr.mxu0 0.0
    %132 = vmatpush1.msra.mxu0 0.0
    %133 = vmatprep.mubr.f32.mxu0 0.0
    %134 = vmatmul.mubr.f32.gmra.mrb[0].mxu0 %v63
    %v135 = vpop.f32.mrb[0].mxu0
    %v136 = vadd.f32 %v59, %v135
    %v137 = vpop.f32.mrb[0].mxu0
    %138 = vdwg.mxu0
    %v139 = vmul.f32 %v136, 0.2
    %v140 = vmax.f32 %v136, %v139
    %v141 = vld [vmem:[%s4] sm:$0xff]
    %v142 = vld [vmem:[%s4 + $0x8] sm:$0xff]
    %v143 = vld [vmem:[%s4 + $0x10] sm:$0xff]
    %v144 = vld [vmem:[%s4 + $0x18] sm:$0xff]
    %v145 = vld [vmem:[%s4 + $0x20] sm:$0xff]
    %v146 = vld [vmem:[%s4 + $0x28] sm:$0xff]
    %v147 = vld [vmem:[%s4 + $0x30] sm:$0xff]
    %v148 = vld [vmem:[%s4 + $0x38] sm:$0xff]
    %v149 = vld [vmem:[%s4 + $0x40] sm:$0xff]
    %v150 = vld [vmem:[%s4 + $0x48] sm:$0xff]
    %v151 = vld [vmem:[%s4 + $0x50] sm:$0xff]
    %v152 = vld [vmem:[%s4 + $0x58] sm:$0xff]
    %v153 = vld [vmem:[%s4 + $0x60] sm:$0xff]
    %v154 = vld [vmem:[%s4 + $0x68] sm:$0xff]
    %v155 = vld [vmem:[%s4 + $0x70] sm:$0xff]
    %v156 = vld [vmem:[%s4 + $0x78] sm:$0xff]
    %v157 = vld [vmem:[%s5] sm:$0x1]
    %v159 = vlaneseq
    %v160 = vshrl.u32 %v159, 7
    %v161 = vsub.s32 0, %v160
    %v162 = vrot.slane %v157, %v161
    %164 = vmatprep.subr.mxu0 0.0
    %165 = vmatpush1.msra.mxu0 %v141
    %166 = vmatprep.subr.mxu0 0.0
    %167 = vmatpush1.msra.mxu0 %v142
    %168 = vmatprep.subr.mxu0 0.0
    %169 = vmatpush1.msra.mxu0 %v143
    %170 = vmatprep.subr.mxu0 0.0
    %171 = vmatpush1.msra.mxu0 %v144
    %172 = vmatprep.subr.mxu0 0.0
    %173 = vmatpush1.msra.mxu0 %v145
    %174 = vmatprep.subr.mxu0 0.0
    %175 = vmatpush1.msra.mxu0 %v146
    %176 = vmatprep.subr.mxu0 0.0
    %177 = vmatpush1.msra.mxu0 %v147
    %178 = vmatprep.subr.mxu0 0.0
    %179 = vmatpush1.msra.mxu0 %v148
    %180 = vmatprep.subr.mxu0 0.0
    %181 = vmatpush1.msra.mxu0 %v149
    %182 = vmatprep.subr.mxu0 0.0
    %183 = vmatpush1.msra.mxu0 %v150
    %184 = vmatprep.subr.mxu0 0.0
    %185 = vmatpush1.msra.mxu0 %v151
    %186 = vmatprep.subr.mxu0 0.0
    %187 = vmatpush1.msra.mxu0 %v152
    %188 = vmatprep.subr.mxu0 0.0
    %189 = vmatpush1.msra.mxu0 %v153
    %190 = vmatprep.subr.mxu0 0.0
    %191 = vmatpush1.msra.mxu0 %v154
    %192 = vmatprep.subr.mxu0 0.0
    %193 = vmatpush1.msra.mxu0 %v155
    %194 = vmatprep.subr.mxu0 0.0
    %195 = vmatpush1.msra.mxu0 %v156
    %196 = vmatprep.subr.mxu0 0.0
    %197 = vmatpush1.msra.mxu0 0.0
    %198 = vmatprep.subr.mxu0 0.0
    %199 = vmatpush1.msra.mxu0 0.0
    %200 = vmatprep.subr.mxu0 0.0
    %201 = vmatpush1.msra.mxu0 0.0
    %202 = vmatprep.subr.mxu0 0.0
    %203 = vmatpush1.msra.mxu0 0.0
    %204 = vmatprep.subr.mxu0 0.0
    %205 = vmatpush1.msra.mxu0 0.0
    %206 = vmatprep.subr.mxu0 0.0
    %207 = vmatpush1.msra.mxu0 0.0
    %208 = vmatprep.subr.mxu0 0.0
    %209 = vmatpush1.msra.mxu0 0.0
    %210 = vmatprep.subr.mxu0 0.0
    %211 = vmatpush1.msra.mxu0 0.0
    %212 = vmatprep.subr.mxu0 0.0
    %213 = vmatpush1.msra.mxu0 0.0
    %214 = vmatprep.subr.mxu0 0.0
    %215 = vmatpush1.msra.mxu0 0.0
    %216 = vmatprep.subr.mxu0 0.0
    %217 = vmatpush1.msra.mxu0 0.0
    %218 = vmatprep.subr.mxu0 0.0
    %219 = vmatpush1.msra.mxu0 0.0
    %220 = vmatprep.subr.mxu0 0.0
    %221 = vmatpush1.msra.mxu0 0.0
    %222 = vmatprep.subr.mxu0 0.0
    %223 = vmatpush1.msra.mxu0 0.0
    %224 = vmatprep.subr.mxu0 0.0
    %225 = vmatpush1.msra.mxu0 0.0
    %226 = vmatprep.subr.mxu0 0.0
    %227 = vmatpush1.msra.mxu0 0.0
    %228 = vmatprep.mubr.f32.mxu0 0.0
    %229 = vmatmul.mubr.f32.gmra.mrb[0].mxu0 %v140
    %v230 = vpop.f32.mrb[0].mxu0
    %v231 = vadd.f32 %v162, %v230
    %v232 = vpop.f32.mrb[0].mxu0
    %233 = vdwg.mxu0
    %v234 = vmul.f32 %v231, 0.2
    %v235 = vmax.f32 %v231, %v234
    %v236 = vld [vmem:[#allocation2] sm:$0xff]
    %v237 = vld [vmem:[#allocation2 + $0x8] sm:$0xff]
    %v238 = vld [vmem:[#allocation2 + $0x10] sm:$0xff]
    %v239 = vld [vmem:[#allocation2 + $0x18] sm:$0xff]
    %v240 = vld [vmem:[#allocation2 + $0x20] sm:$0xff]
    %v241 = vld [vmem:[#allocation2 + $0x28] sm:$0xff]
    %v242 = vld [vmem:[#allocation2 + $0x30] sm:$0xff]
    %v243 = vld [vmem:[#allocation2 + $0x38] sm:$0xff]
    %v244 = vld [vmem:[#allocation2 + $0x40] sm:$0xff]
    %v245 = vld [vmem:[#allocation2 + $0x48] sm:$0xff]
    %v246 = vld [vmem:[#allocation2 + $0x50] sm:$0xff]
    %v247 = vld [vmem:[#allocation2 + $0x58] sm:$0xff]
    %v248 = vld [vmem:[#allocation2 + $0x60] sm:$0xff]
    %v249 = vld [vmem:[#allocation2 + $0x68] sm:$0xff]
    %v250 = vld [vmem:[#allocation2 + $0x70] sm:$0xff]
    %v251 = vld [vmem:[#allocation2 + $0x78] sm:$0xff]
    %v252 = vld [vmem:[%s7] sm:$0x1]
    %v254 = vlaneseq
    %v255 = vshrl.u32 %v254, 7
    %v256 = vsub.s32 0, %v255
    %v257 = vrot.slane %v252, %v256
    %259 = vmatprep.subr.mxu0 0.0
    %260 = vmatpush1.msra.mxu0 %v236
    %261 = vmatprep.subr.mxu0 0.0
    %262 = vmatpush1.msra.mxu0 %v237
    %263 = vmatprep.subr.mxu0 0.0
    %264 = vmatpush1.msra.mxu0 %v238
    %265 = vmatprep.subr.mxu0 0.0
    %266 = vmatpush1.msra.mxu0 %v239
    %267 = vmatprep.subr.mxu0 0.0
    %268 = vmatpush1.msra.mxu0 %v240
    %269 = vmatprep.subr.mxu0 0.0
    %270 = vmatpush1.msra.mxu0 %v241
    %271 = vmatprep.subr.mxu0 0.0
    %272 = vmatpush1.msra.mxu0 %v242
    %273 = vmatprep.subr.mxu0 0.0
    %274 = vmatpush1.msra.mxu0 %v243
    %275 = vmatprep.subr.mxu0 0.0
    %276 = vmatpush1.msra.mxu0 %v244
    %277 = vmatprep.subr.mxu0 0.0
    %278 = vmatpush1.msra.mxu0 %v245
    %279 = vmatprep.subr.mxu0 0.0
    %280 = vmatpush1.msra.mxu0 %v246
    %281 = vmatprep.subr.mxu0 0.0
    %282 = vmatpush1.msra.mxu0 %v247
    %283 = vmatprep.subr.mxu0 0.0
    %284 = vmatpush1.msra.mxu0 %v248
    %285 = vmatprep.subr.mxu0 0.0
    %286 = vmatpush1.msra.mxu0 %v249
    %287 = vmatprep.subr.mxu0 0.0
    %288 = vmatpush1.msra.mxu0 %v250
    %289 = vmatprep.subr.mxu0 0.0
    %290 = vmatpush1.msra.mxu0 %v251
    %291 = vmatprep.subr.mxu0 0.0
    %292 = vmatpush1.msra.mxu0 0.0
    %293 = vmatprep.subr.mxu0 0.0
    %294 = vmatpush1.msra.mxu0 0.0
    %295 = vmatprep.subr.mxu0 0.0
    %296 = vmatpush1.msra.mxu0 0.0
    %297 = vmatprep.subr.mxu0 0.0
    %298 = vmatpush1.msra.mxu0 0.0
    %299 = vmatprep.subr.mxu0 0.0
    %300 = vmatpush1.msra.mxu0 0.0
    %301 = vmatprep.subr.mxu0 0.0
    %302 = vmatpush1.msra.mxu0 0.0
    %303 = vmatprep.subr.mxu0 0.0
    %304 = vmatpush1.msra.mxu0 0.0
    %305 = vmatprep.subr.mxu0 0.0
    %306 = vmatpush1.msra.mxu0 0.0
    %307 = vmatprep.subr.mxu0 0.0
    %308 = vmatpush1.msra.mxu0 0.0
    %309 = vmatprep.subr.mxu0 0.0
    %310 = vmatpush1.msra.mxu0 0.0
    %311 = vmatprep.subr.mxu0 0.0
    %312 = vmatpush1.msra.mxu0 0.0
    %313 = vmatprep.subr.mxu0 0.0
    %314 = vmatpush1.msra.mxu0 0.0
    %315 = vmatprep.subr.mxu0 0.0
    %316 = vmatpush1.msra.mxu0 0.0
    %317 = vmatprep.subr.mxu0 0.0
    %318 = vmatpush1.msra.mxu0 0.0
    %319 = vmatprep.subr.mxu0 0.0
    %320 = vmatpush1.msra.mxu0 0.0
    %321 = vmatprep.subr.mxu0 0.0
    %322 = vmatpush1.msra.mxu0 0.0
    %323 = vmatprep.mubr.f32.mxu0 0.0
    %324 = vmatmul.mubr.f32.gmra.mrb[0].mxu0 %v235
    %v325 = vpop.f32.mrb[0].mxu0
    %v326 = vadd.f32 %v257, %v325
    %v327 = vpop.f32.mrb[0].mxu0
    %328 = vdwg.mxu0
    %v329 = vmul.f32 %v326, 0.2
    %v330 = vmax.f32 %v326, %v329
    %v331 = vld [vmem:[%s8] sm:$0xff]
    %v332 = vld [vmem:[%s8 + $0x8] sm:$0xff]
    %v333 = vld [vmem:[%s8 + $0x10] sm:$0xff]
    %v334 = vld [vmem:[%s8 + $0x18] sm:$0xff]
    %v335 = vld [vmem:[%s8 + $0x20] sm:$0xff]
    %v336 = vld [vmem:[%s8 + $0x28] sm:$0xff]
    %v337 = vld [vmem:[%s8 + $0x30] sm:$0xff]
    %v338 = vld [vmem:[%s8 + $0x38] sm:$0xff]
    %v339 = vld [vmem:[%s8 + $0x40] sm:$0xff]
    %v340 = vld [vmem:[%s8 + $0x48] sm:$0xff]
    %v341 = vld [vmem:[%s8 + $0x50] sm:$0xff]
    %v342 = vld [vmem:[%s8 + $0x58] sm:$0xff]
    %v343 = vld [vmem:[%s8 + $0x60] sm:$0xff]
    %v344 = vld [vmem:[%s8 + $0x68] sm:$0xff]
    %v345 = vld [vmem:[%s8 + $0x70] sm:$0xff]
    %v346 = vld [vmem:[%s8 + $0x78] sm:$0xff]
    %v347 = vld [vmem:[%s9] sm:$0x1]
    %v349 = vlaneseq
    %v350 = vshrl.u32 %v349, 7
    %v351 = vsub.s32 0, %v350
    %v352 = vrot.slane %v347, %v351
    %354 = vmatprep.subr.mxu0 0.0
    %355 = vmatpush1.msra.mxu0 %v331
    %356 = vmatprep.subr.mxu0 0.0
    %357 = vmatpush1.msra.mxu0 %v332
    %358 = vmatprep.subr.mxu0 0.0
    %359 = vmatpush1.msra.mxu0 %v333
    %360 = vmatprep.subr.mxu0 0.0
    %361 = vmatpush1.msra.mxu0 %v334
    %362 = vmatprep.subr.mxu0 0.0
    %363 = vmatpush1.msra.mxu0 %v335
    %364 = vmatprep.subr.mxu0 0.0
    %365 = vmatpush1.msra.mxu0 %v336
    %366 = vmatprep.subr.mxu0 0.0
    %367 = vmatpush1.msra.mxu0 %v337
    %368 = vmatprep.subr.mxu0 0.0
    %369 = vmatpush1.msra.mxu0 %v338
    %370 = vmatprep.subr.mxu0 0.0
    %371 = vmatpush1.msra.mxu0 %v339
    %372 = vmatprep.subr.mxu0 0.0
    %373 = vmatpush1.msra.mxu0 %v340
    %374 = vmatprep.subr.mxu0 0.0
    %375 = vmatpush1.msra.mxu0 %v341
    %376 = vmatprep.subr.mxu0 0.0
    %377 = vmatpush1.msra.mxu0 %v342
    %378 = vmatprep.subr.mxu0 0.0
    %379 = vmatpush1.msra.mxu0 %v343
    %380 = vmatprep.subr.mxu0 0.0
    %381 = vmatpush1.msra.mxu0 %v344
    %382 = vmatprep.subr.mxu0 0.0
    %383 = vmatpush1.msra.mxu0 %v345
    %384 = vmatprep.subr.mxu0 0.0
    %385 = vmatpush1.msra.mxu0 %v346
    %386 = vmatprep.subr.mxu0 0.0
    %387 = vmatpush1.msra.mxu0 0.0
    %388 = vmatprep.subr.mxu0 0.0
    %389 = vmatpush1.msra.mxu0 0.0
    %390 = vmatprep.subr.mxu0 0.0
    %391 = vmatpush1.msra.mxu0 0.0
    %392 = vmatprep.subr.mxu0 0.0
    %393 = vmatpush1.msra.mxu0 0.0
    %394 = vmatprep.subr.mxu0 0.0
    %395 = vmatpush1.msra.mxu0 0.0
    %396 = vmatprep.subr.mxu0 0.0
    %397 = vmatpush1.msra.mxu0 0.0
    %398 = vmatprep.subr.mxu0 0.0
    %399 = vmatpush1.msra.mxu0 0.0
    %400 = vmatprep.subr.mxu0 0.0
    %401 = vmatpush1.msra.mxu0 0.0
    %402 = vmatprep.subr.mxu0 0.0
    %403 = vmatpush1.msra.mxu0 0.0
    %404 = vmatprep.subr.mxu0 0.0
    %405 = vmatpush1.msra.mxu0 0.0
    %406 = vmatprep.subr.mxu0 0.0
    %407 = vmatpush1.msra.mxu0 0.0
    %408 = vmatprep.subr.mxu0 0.0
    %409 = vmatpush1.msra.mxu0 0.0
    %410 = vmatprep.subr.mxu0 0.0
    %411 = vmatpush1.msra.mxu0 0.0
    %412 = vmatprep.subr.mxu0 0.0
    %413 = vmatpush1.msra.mxu0 0.0
    %414 = vmatprep.subr.mxu0 0.0
    %415 = vmatpush1.msra.mxu0 0.0
    %416 = vmatprep.subr.mxu0 0.0
    %417 = vmatpush1.msra.mxu0 0.0
    %418 = vmatprep.mubr.f32.mxu0 0.0
    %419 = vmatmul.mubr.f32.gmra.mrb[0].mxu0 %v330
    %v420 = vpop.f32.mrb[0].mxu0
    %v421 = vadd.f32 %v352, %v420
    %v422 = vpop.f32.mrb[0].mxu0
    %423 = vdwg.mxu0
    %v424 = vld [vmem:[%s1] sm:$0xff]
    %v425 = vmul.f32 %v421, 1.442695
    %v426 = vpow.pop %v425
    %v427 = vmul.f32 %v424, %v426
    %429 = vrot.lane.b32.xlu0 %v421, 124
    %v430 = vpop.permute.xlu0 %429
    %v432 = vadd.f32 %v427, %v430
    %433 = vst.msk [vmem:[%s10] sm:$0xff] %vm61, %v432
    %v434 = vsel %vm61, %v421, 0.0
    %435 = vadd.xlane.f32.xlu0 %v434
    %v436 = vpop.xlane.xlu0 %435
    %p437 = scmp.eq.s32.totalorder 0, 0
    // Predicated region
    $region46: #{tpu_custom_call.1} parent=1 // pred_check
      %p438 = pneg %p437
    $region47: #{tpu_custom_call.1} parent=1 // pred_check_branch
      %440 = sbr.rel (%p438) target = $region49
    $region48: #{tpu_custom_call.1} parent=1 // pred_region
      %441 = vst [vmem:[#allocation5] sm:$0xff] %v436
    $region49: #{tpu_custom_call.1} parent=1 // pred_fallthru
      _
    %p442 = scmp.gt.s32.totalorder 0, 0
    // Predicated region
    $region50: #{tpu_custom_call.1} parent=1 // pred_check
      %p443 = pneg %p442
    $region51: #{tpu_custom_call.1} parent=1 // pred_check_branch
      %445 = sbr.rel (%p443) target = $region53
    $region52: #{tpu_custom_call.1} parent=1 // pred_region
      %v446 = vld [vmem:[#allocation5] sm:$0xff]
      %v447 = vadd.f32 %v446, %v436
      %448 = vst [vmem:[#allocation5] sm:$0xff] %v447
    $region53: #{tpu_custom_call.1} parent=1 // pred_fallthru
      _
    // Predicated region
    $region54: #{tpu_custom_call.1} parent=1 // pred_check
      _
    $region55: #{tpu_custom_call.1} parent=1 // pred_check_branch
      %450 = sbr.rel (0) target = $region57
    $region56: #{tpu_custom_call.1} parent=1 // pred_region
      _
    $region57: #{tpu_custom_call.1} parent=1 // pred_fallthru
      _
    // Predicated region
    $region58: #{tpu_custom_call.1} parent=1 // pred_check
      _
    $region59: #{tpu_custom_call.1} parent=1 // pred_check_branch
      %452 = sbr.rel (0) target = $region61
    $region60: #{tpu_custom_call.1} parent=1 // pred_region
      %s454 = ssub.s32 128, 128
      %455 = vsyncadd [#allocation4], %s454
      %s457 = sshll.u32 [#allocation5], 4
      %s458 = int_to_ptr.vmem [resolvable:$true] %s457
      %460 = dma.vmem_to_hbm [thread:$0]  %s458, 128, %s11, [#allocation4]
    $region61: #{tpu_custom_call.1} parent=1 // pred_fallthru
      _
    // Predicated region
    $region62: #{tpu_custom_call.1} parent=1 // pred_check
      _
    $region63: #{tpu_custom_call.1} parent=1 // pred_check_branch
      %462 = sbr.rel (0) target = $region65
    $region64: #{tpu_custom_call.1} parent=1 // pred_region
      _
    $region65: #{tpu_custom_call.1} parent=1 // pred_fallthru
      _
    // Predicated region
    $region66: #{tpu_custom_call.1} parent=1 // pred_check
      _
    $region67: #{tpu_custom_call.1} parent=1 // pred_check_branch
      %464 = sbr.rel (0) target = $region69
    $region68: #{tpu_custom_call.1} parent=1 // pred_region
      %465 = dma.done [#allocation4], 128
    $region69: #{tpu_custom_call.1} parent=1 // pred_fallthru
      _
    %466 = vsyncpa [#allocation3], 1
    %467 = vsyncpa [#allocation4], 1

// kernel: tpu_custom_call.1
$region0: #{tpu_custom_call.1}
  #allocation0 [shape = 'u32[]', space=smem, size = 0x4, offset = 0x4, fixed_abs, tag = 'smem constant byte address 0x4 - core index']
  #allocation1 [shape = 'u32[144,128]{1,0:T(1,128)}', space=vmem, size = 0x12000, scoped, tag = 'internal scratch']
  %s0 = inlined_call_operand.vmem [shape: f32[8,4], index: 0, kind: input, shape index: {}]
  %s1 = inlined_call_operand.vmem [shape: f32[1,8,4], index: 1, kind: input, shape index: {}]
  %s2 = inlined_call_operand.vmem [shape: f32[1,4,128], index: 2, kind: input, shape index: {}]
  %s3 = inlined_call_operand.vmem [shape: f32[1,1,128], index: 3, kind: input, shape index: {}]
  %s4 = inlined_call_operand.vmem [shape: f32[1,128,128], index: 4, kind: input, shape index: {}]
  %s5 = inlined_call_operand.vmem [shape: f32[1,1,128], index: 5, kind: input, shape index: {}]
  %s6 = inlined_call_operand.hbm [shape: f32[1,128,128], index: 6, kind: input, shape index: {}]
  %s7 = inlined_call_operand.vmem [shape: f32[1,1,128], index: 7, kind: input, shape index: {}]
  %s8 = inlined_call_operand.vmem [shape: f32[1,128,8], index: 8, kind: input, shape index: {}]
  %s9 = inlined_call_operand.vmem [shape: f32[1,1,8], index: 9, kind: input, shape index: {}]
  %s10 = inlined_call_operand.vmem [shape: f32[1,8,4], index: 10, kind: output, shape index: {0}]
  %s11 = inlined_call_operand.hbm [shape: f32[8,128], index: 11, kind: output, shape index: {1}]
  %12 = xla_tuple %s10, %s11
  %s13 = sld [smem:[#allocation0]]
  $region70: #{tpu_custom_call.1} parent=0
    _
  %s15 = ssub.s32 1, %s13
  %s16 = scalar_select 0, %s15, %s13
  $region1: #{tpu_custom_call.1} parent=0
    #allocation2 [shape = 'u8[65536]{0}', space=vmem, size = 0x10000, scoped, tag = 'input window, operand 6, single buffered']
    #allocation3 [shape = 's32[1]{0}', space=sflag, size = 0x4, scoped, tag = 'scoped memory for tpu_custom_call.1']
    #allocation4 [shape = 's32[1]{0}', space=sflag, size = 0x4, scoped, tag = 'scoped memory for tpu_custom_call.1']
    #allocation5 [shape = 'u8[4096]{0}', space=vmem, size = 0x1000, scoped, tag = 'output window, operand 1, single buffered']
    %17 = vsyncpa [#allocation3], 0
    %18 = vsyncpa [#allocation4], 0
    // Predicated region
    $region2: #{tpu_custom_call.1} parent=1 // pred_check
      _
    $region3: #{tpu_custom_call.1} parent=1 // pred_check_branch
      %20 = sbr.rel (0) target = $region5
    $region4: #{tpu_custom_call.1} parent=1 // pred_region
      _
    $region5: #{tpu_custom_call.1} parent=1 // pred_fallthru
      _
    // Predicated region
    $region6: #{tpu_custom_call.1} parent=1 // pred_check
      _
    $region7: #{tpu_custom_call.1} parent=1 // pred_check_branch
      %22 = sbr.rel (0) target = $region9
    $region8: #{tpu_custom_call.1} parent=1 // pred_region
      _
    $region9: #{tpu_custom_call.1} parent=1 // pred_fallthru
      _
    // Predicated region
    $region10: #{tpu_custom_call.1} parent=1 // pred_check
      _
    $region11: #{tpu_custom_call.1} parent=1 // pred_check_branch
      %24 = sbr.rel (0) target = $region13
    $region12: #{tpu_custom_call.1} parent=1 // pred_region
      _
    $region13: #{tpu_custom_call.1} parent=1 // pred_fallthru
      _
    // Predicated region
    $region14: #{tpu_custom_call.1} parent=1 // pred_check
      _
    $region15: #{tpu_custom_call.1} parent=1 // pred_check_branch
      %26 = sbr.rel (0) target = $region17
    $region16: #{tpu_custom_call.1} parent=1 // pred_region
      _
    $region17: #{tpu_custom_call.1} parent=1 // pred_fallthru
      _
    // Predicated region
    $region18: #{tpu_custom_call.1} parent=1 // pred_check
      _
    $region19: #{tpu_custom_call.1} parent=1 // pred_check_branch
      %28 = sbr.rel (0) target = $region21
    $region20: #{tpu_custom_call.1} parent=1 // pred_region
      _
    $region21: #{tpu_custom_call.1} parent=1 // pred_fallthru
      _
    // Predicated region
    $region22: #{tpu_custom_call.1} parent=1 // pred_check
      _
    $region23: #{tpu_custom_call.1} parent=1 // pred_check_branch
      %30 = sbr.rel (0) target = $region25
    $region24: #{tpu_custom_call.1} parent=1 // pred_region
      _
    $region25: #{tpu_custom_call.1} parent=1 // pred_fallthru
      _
    // Predicated region
    $region26: #{tpu_custom_call.1} parent=1 // pred_check
      _
    $region27: #{tpu_custom_call.1} parent=1 // pred_check_branch
      %32 = sbr.rel (0) target = $region29
    $region28: #{tpu_custom_call.1} parent=1 // pred_region
      %s34 = ssub.s32 2048, 2048
      %35 = vsyncadd [#allocation3], %s34
      %s36 = sshll.u32 [#allocation2], 4
      %s37 = int_to_ptr.vmem [resolvable:$true] %s36
      %42 = dma.hbm_to_vmem [thread:$0]  %s6, 2048, %s37, [#allocation3], 128, 128, 8
    $region29: #{tpu_custom_call.1} parent=1 // pred_fallthru
      _
    // Predicated region
    $region30: #{tpu_custom_call.1} parent=1 // pred_check
      _
    $region31: #{tpu_custom_call.1} parent=1 // pred_check_branch
      %44 = sbr.rel (0) target = $region33
    $region32: #{tpu_custom_call.1} parent=1 // pred_region
      _
    $region33: #{tpu_custom_call.1} parent=1 // pred_fallthru
      _
    // Predicated region
    $region34: #{tpu_custom_call.1} parent=1 // pred_check
      _
    $region35: #{tpu_custom_call.1} parent=1 // pred_check_branch
      %46 = sbr.rel (0) target = $region37
    $region36: #{tpu_custom_call.1} parent=1 // pred_region
      _
    $region37: #{tpu_custom_call.1} parent=1 // pred_fallthru
      _
    // Predicated region
    $region38: #{tpu_custom_call.1} parent=1 // pred_check
      _
    $region39: #{tpu_custom_call.1} parent=1 // pred_check_branch
      %48 = sbr.rel (0) target = $region41
    $region40: #{tpu_custom_call.1} parent=1 // pred_region
      _
    $region41: #{tpu_custom_call.1} parent=1 // pred_fallthru
      _
    // Predicated region
    $region42: #{tpu_custom_call.1} parent=1 // pred_check
      _
    $region43: #{tpu_custom_call.1} parent=1 // pred_check_branch
      %50 = sbr.rel (0) target = $region45
    $region44: #{tpu_custom_call.1} parent=1 // pred_region
      %51 = dma.done [#allocation3], 2048
    $region45: #{tpu_custom_call.1} parent=1 // pred_fallthru
      _
    %v52 = vld [vmem:[%s0] sm:$0xff]
    %v53 = vld [vmem:[%s2] sm:$0xf]
    %v54 = vld [vmem:[%s3] sm:$0x1]
    %v56 = vlaneseq
    %v57 = vshrl.u32 %v56, 7
    %v58 = vsub.s32 0, %v57
    %v59 = vrot.slane %v54, %v58
    %vm61 = vcmask 31744
    %v63 = vsel %vm61, %v52, 0
    %vm65 = vcmask 1043456
    %v67 = vsel %vm65, %v53, 0
    %69 = vmatprep.subr.mxu0 0.0
    %70 = vmatpush1.msra.mxu0 %v67
    %71 = vmatprep.subr.mxu0 0.0
    %72 = vmatpush1.msra.mxu0 0.0
    %73 = vmatprep.subr.mxu0 0.0
    %74 = vmatpush1.msra.mxu0 0.0
    %75 = vmatprep.subr.mxu0 0.0
    %76 = vmatpush1.msra.mxu0 0.0
    %77 = vmatprep.subr.mxu0 0.0
    %78 = vmatpush1.msra.mxu0 0.0
    %79 = vmatprep.subr.mxu0 0.0
    %80 = vmatpush1.msra.mxu0 0.0
    %81 = vmatprep.subr.mxu0 0.0
    %82 = vmatpush1.msra.mxu0 0.0
    %83 = vmatprep.subr.mxu0 0.0
    %84 = vmatpush1.msra.mxu0 0.0
    %85 = vmatprep.subr.mxu0 0.0
    %86 = vmatpush1.msra.mxu0 0.0
    %87 = vmatprep.subr.mxu0 0.0
    %88 = vmatpush1.msra.mxu0 0.0
    %89 = vmatprep.subr.mxu0 0.0
    %90 = vmatpush1.msra.mxu0 0.0
    %91 = vmatprep.subr.mxu0 0.0
    %92 = vmatpush1.msra.mxu0 0.0
    %93 = vmatprep.subr.mxu0 0.0
    %94 = vmatpush1.msra.mxu0 0.0
    %95 = vmatprep.subr.mxu0 0.0
    %96 = vmatpush1.msra.mxu0 0.0
    %97 = vmatprep.subr.mxu0 0.0
    %98 = vmatpush1.msra.mxu0 0.0
    %99 = vmatprep.subr.mxu0 0.0
    %100 = vmatpush1.msra.mxu0 0.0
    %101 = vmatprep.subr.mxu0 0.0
    %102 = vmatpush1.msra.mxu0 0.0
    %103 = vmatprep.subr.mxu0 0.0
    %104 = vmatpush1.msra.mxu0 0.0
    %105 = vmatprep.subr.mxu0 0.0
    %106 = vmatpush1.msra.mxu0 0.0
    %107 = vmatprep.subr.mxu0 0.0
    %108 = vmatpush1.msra.mxu0 0.0
    %109 = vmatprep.subr.mxu0 0.0
    %110 = vmatpush1.msra.mxu0 0.0
    %111 = vmatprep.subr.mxu0 0.0
    %112 = vmatpush1.msra.mxu0 0.0
    %113 = vmatprep.subr.mxu0 0.0
    %114 = vmatpush1.msra.mxu0 0.0
    %115 = vmatprep.subr.mxu0 0.0
    %116 = vmatpush1.msra.mxu0 0.0
    %117 = vmatprep.subr.mxu0 0.0
    %118 = vmatpush1.msra.mxu0 0.0
    %119 = vmatprep.subr.mxu0 0.0
    %120 = vmatpush1.msra.mxu0 0.0
    %121 = vmatprep.subr.mxu0 0.0
    %122 = vmatpush1.msra.mxu0 0.0
    %123 = vmatprep.subr.mxu0 0.0
    %124 = vmatpush1.msra.mxu0 0.0
    %125 = vmatprep.subr.mxu0 0.0
    %126 = vmatpush1.msra.mxu0 0.0
    %127 = vmatprep.subr.mxu0 0.0
    %128 = vmatpush1.msra.mxu0 0.0
    %129 = vmatprep.subr.mxu0 0.0
    %130 = vmatpush1.msra.mxu0 0.0
    %131 = vmatprep.subr.mxu0 0.0
    %132 = vmatpush1.msra.mxu0 0.0
    %133 = vmatprep.mubr.f32.mxu0 0.0
    %134 = vmatmul.mubr.f32.gmra.mrb[0].mxu0 %v63
    %v135 = vpop.f32.mrb[0].mxu0
    %v136 = vadd.f32 %v59, %v135
    %v137 = vpop.f32.mrb[0].mxu0
    %138 = vdwg.mxu0
    %v139 = vmul.f32 %v136, 0.2
    %v140 = vmax.f32 %v136, %v139
    %v141 = vld [vmem:[%s4] sm:$0xff]
    %v142 = vld [vmem:[%s4 + $0x8] sm:$0xff]
    %v143 = vld [vmem:[%s4 + $0x10] sm:$0xff]
    %v144 = vld [vmem:[%s4 + $0x18] sm:$0xff]
    %v145 = vld [vmem:[%s4 + $0x20] sm:$0xff]
    %v146 = vld [vmem:[%s4 + $0x28] sm:$0xff]
    %v147 = vld [vmem:[%s4 + $0x30] sm:$0xff]
    %v148 = vld [vmem:[%s4 + $0x38] sm:$0xff]
    %v149 = vld [vmem:[%s4 + $0x40] sm:$0xff]
    %v150 = vld [vmem:[%s4 + $0x48] sm:$0xff]
    %v151 = vld [vmem:[%s4 + $0x50] sm:$0xff]
    %v152 = vld [vmem:[%s4 + $0x58] sm:$0xff]
    %v153 = vld [vmem:[%s4 + $0x60] sm:$0xff]
    %v154 = vld [vmem:[%s4 + $0x68] sm:$0xff]
    %v155 = vld [vmem:[%s4 + $0x70] sm:$0xff]
    %v156 = vld [vmem:[%s4 + $0x78] sm:$0xff]
    %v157 = vld [vmem:[%s5] sm:$0x1]
    %v159 = vlaneseq
    %v160 = vshrl.u32 %v159, 7
    %v161 = vsub.s32 0, %v160
    %v162 = vrot.slane %v157, %v161
    %164 = vmatprep.subr.mxu0 0.0
    %165 = vmatpush1.msra.mxu0 %v141
    %166 = vmatprep.subr.mxu0 0.0
    %167 = vmatpush1.msra.mxu0 %v142
    %168 = vmatprep.subr.mxu0 0.0
    %169 = vmatpush1.msra.mxu0 %v143
    %170 = vmatprep.subr.mxu0 0.0
    %171 = vmatpush1.msra.mxu0 %v144
    %172 = vmatprep.subr.mxu0 0.0
    %173 = vmatpush1.msra.mxu0 %v145
    %174 = vmatprep.subr.mxu0 0.0
    %175 = vmatpush1.msra.mxu0 %v146
    %176 = vmatprep.subr.mxu0 0.0
    %177 = vmatpush1.msra.mxu0 %v147
    %178 = vmatprep.subr.mxu0 0.0
    %179 = vmatpush1.msra.mxu0 %v148
    %180 = vmatprep.subr.mxu0 0.0
    %181 = vmatpush1.msra.mxu0 %v149
    %182 = vmatprep.subr.mxu0 0.0
    %183 = vmatpush1.msra.mxu0 %v150
    %184 = vmatprep.subr.mxu0 0.0
    %185 = vmatpush1.msra.mxu0 %v151
    %186 = vmatprep.subr.mxu0 0.0
    %187 = vmatpush1.msra.mxu0 %v152
    %188 = vmatprep.subr.mxu0 0.0
    %189 = vmatpush1.msra.mxu0 %v153
    %190 = vmatprep.subr.mxu0 0.0
    %191 = vmatpush1.msra.mxu0 %v154
    %192 = vmatprep.subr.mxu0 0.0
    %193 = vmatpush1.msra.mxu0 %v155
    %194 = vmatprep.subr.mxu0 0.0
    %195 = vmatpush1.msra.mxu0 %v156
    %196 = vmatprep.subr.mxu0 0.0
    %197 = vmatpush1.msra.mxu0 0.0
    %198 = vmatprep.subr.mxu0 0.0
    %199 = vmatpush1.msra.mxu0 0.0
    %200 = vmatprep.subr.mxu0 0.0
    %201 = vmatpush1.msra.mxu0 0.0
    %202 = vmatprep.subr.mxu0 0.0
    %203 = vmatpush1.msra.mxu0 0.0
    %204 = vmatprep.subr.mxu0 0.0
    %205 = vmatpush1.msra.mxu0 0.0
    %206 = vmatprep.subr.mxu0 0.0
    %207 = vmatpush1.msra.mxu0 0.0
    %208 = vmatprep.subr.mxu0 0.0
    %209 = vmatpush1.msra.mxu0 0.0
    %210 = vmatprep.subr.mxu0 0.0
    %211 = vmatpush1.msra.mxu0 0.0
    %212 = vmatprep.subr.mxu0 0.0
    %213 = vmatpush1.msra.mxu0 0.0
    %214 = vmatprep.subr.mxu0 0.0
    %215 = vmatpush1.msra.mxu0 0.0
    %216 = vmatprep.subr.mxu0 0.0
    %217 = vmatpush1.msra.mxu0 0.0
    %218 = vmatprep.subr.mxu0 0.0
    %219 = vmatpush1.msra.mxu0 0.0
    %220 = vmatprep.subr.mxu0 0.0
    %221 = vmatpush1.msra.mxu0 0.0
    %222 = vmatprep.subr.mxu0 0.0
    %223 = vmatpush1.msra.mxu0 0.0
    %224 = vmatprep.subr.mxu0 0.0
    %225 = vmatpush1.msra.mxu0 0.0
    %226 = vmatprep.subr.mxu0 0.0
    %227 = vmatpush1.msra.mxu0 0.0
    %228 = vmatprep.mubr.f32.mxu0 0.0
    %229 = vmatmul.mubr.f32.gmra.mrb[0].mxu0 %v140
    %v230 = vpop.f32.mrb[0].mxu0
    %v231 = vadd.f32 %v162, %v230
    %v232 = vpop.f32.mrb[0].mxu0
    %233 = vdwg.mxu0
    %v234 = vmul.f32 %v231, 0.2
    %v235 = vmax.f32 %v231, %v234
    %v236 = vld [vmem:[#allocation2] sm:$0xff]
    %v237 = vld [vmem:[#allocation2 + $0x8] sm:$0xff]
    %v238 = vld [vmem:[#allocation2 + $0x10] sm:$0xff]
    %v239 = vld [vmem:[#allocation2 + $0x18] sm:$0xff]
    %v240 = vld [vmem:[#allocation2 + $0x20] sm:$0xff]
    %v241 = vld [vmem:[#allocation2 + $0x28] sm:$0xff]
    %v242 = vld [vmem:[#allocation2 + $0x30] sm:$0xff]
    %v243 = vld [vmem:[#allocation2 + $0x38] sm:$0xff]
    %v244 = vld [vmem:[#allocation2 + $0x40] sm:$0xff]
    %v245 = vld [vmem:[#allocation2 + $0x48] sm:$0xff]
    %v246 = vld [vmem:[#allocation2 + $0x50] sm:$0xff]
    %v247 = vld [vmem:[#allocation2 + $0x58] sm:$0xff]
    %v248 = vld [vmem:[#allocation2 + $0x60] sm:$0xff]
    %v249 = vld [vmem:[#allocation2 + $0x68] sm:$0xff]
    %v250 = vld [vmem:[#allocation2 + $0x70] sm:$0xff]
    %v251 = vld [vmem:[#allocation2 + $0x78] sm:$0xff]
    %v252 = vld [vmem:[%s7] sm:$0x1]
    %v254 = vlaneseq
    %v255 = vshrl.u32 %v254, 7
    %v256 = vsub.s32 0, %v255
    %v257 = vrot.slane %v252, %v256
    %259 = vmatprep.subr.mxu0 0.0
    %260 = vmatpush1.msra.mxu0 %v236
    %261 = vmatprep.subr.mxu0 0.0
    %262 = vmatpush1.msra.mxu0 %v237
    %263 = vmatprep.subr.mxu0 0.0
    %264 = vmatpush1.msra.mxu0 %v238
    %265 = vmatprep.subr.mxu0 0.0
    %266 = vmatpush1.msra.mxu0 %v239
    %267 = vmatprep.subr.mxu0 0.0
    %268 = vmatpush1.msra.mxu0 %v240
    %269 = vmatprep.subr.mxu0 0.0
    %270 = vmatpush1.msra.mxu0 %v241
    %271 = vmatprep.subr.mxu0 0.0
    %272 = vmatpush1.msra.mxu0 %v242
    %273 = vmatprep.subr.mxu0 0.0
    %274 = vmatpush1.msra.mxu0 %v243
    %275 = vmatprep.subr.mxu0 0.0
    %276 = vmatpush1.msra.mxu0 %v244
    %277 = vmatprep.subr.mxu0 0.0
    %278 = vmatpush1.msra.mxu0 %v245
    %279 = vmatprep.subr.mxu0 0.0
    %280 = vmatpush1.msra.mxu0 %v246
    %281 = vmatprep.subr.mxu0 0.0
    %282 = vmatpush1.msra.mxu0 %v247
    %283 = vmatprep.subr.mxu0 0.0
    %284 = vmatpush1.msra.mxu0 %v248
    %285 = vmatprep.subr.mxu0 0.0
    %286 = vmatpush1.msra.mxu0 %v249
    %287 = vmatprep.subr.mxu0 0.0
    %288 = vmatpush1.msra.mxu0 %v250
    %289 = vmatprep.subr.mxu0 0.0
    %290 = vmatpush1.msra.mxu0 %v251
    %291 = vmatprep.subr.mxu0 0.0
    %292 = vmatpush1.msra.mxu0 0.0
    %293 = vmatprep.subr.mxu0 0.0
    %294 = vmatpush1.msra.mxu0 0.0
    %295 = vmatprep.subr.mxu0 0.0
    %296 = vmatpush1.msra.mxu0 0.0
    %297 = vmatprep.subr.mxu0 0.0
    %298 = vmatpush1.msra.mxu0 0.0
    %299 = vmatprep.subr.mxu0 0.0
    %300 = vmatpush1.msra.mxu0 0.0
    %301 = vmatprep.subr.mxu0 0.0
    %302 = vmatpush1.msra.mxu0 0.0
    %303 = vmatprep.subr.mxu0 0.0
    %304 = vmatpush1.msra.mxu0 0.0
    %305 = vmatprep.subr.mxu0 0.0
    %306 = vmatpush1.msra.mxu0 0.0
    %307 = vmatprep.subr.mxu0 0.0
    %308 = vmatpush1.msra.mxu0 0.0
    %309 = vmatprep.subr.mxu0 0.0
    %310 = vmatpush1.msra.mxu0 0.0
    %311 = vmatprep.subr.mxu0 0.0
    %312 = vmatpush1.msra.mxu0 0.0
    %313 = vmatprep.subr.mxu0 0.0
    %314 = vmatpush1.msra.mxu0 0.0
    %315 = vmatprep.subr.mxu0 0.0
    %316 = vmatpush1.msra.mxu0 0.0
    %317 = vmatprep.subr.mxu0 0.0
    %318 = vmatpush1.msra.mxu0 0.0
    %319 = vmatprep.subr.mxu0 0.0
    %320 = vmatpush1.msra.mxu0 0.0
    %321 = vmatprep.subr.mxu0 0.0
    %322 = vmatpush1.msra.mxu0 0.0
    %323 = vmatprep.mubr.f32.mxu0 0.0
    %324 = vmatmul.mubr.f32.gmra.mrb[0].mxu0 %v235
    %v325 = vpop.f32.mrb[0].mxu0
    %v326 = vadd.f32 %v257, %v325
    %v327 = vpop.f32.mrb[0].mxu0
    %328 = vdwg.mxu0
    %v329 = vmul.f32 %v326, 0.2
    %v330 = vmax.f32 %v326, %v329
    %v331 = vld [vmem:[%s8] sm:$0xff]
    %v332 = vld [vmem:[%s8 + $0x8] sm:$0xff]
    %v333 = vld [vmem:[%s8 + $0x10] sm:$0xff]
    %v334 = vld [vmem:[%s8 + $0x18] sm:$0xff]
    %v335 = vld [vmem:[%s8 + $0x20] sm:$0xff]
    %v336 = vld [vmem:[%s8 + $0x28] sm:$0xff]
    %v337 = vld [vmem:[%s8 + $0x30] sm:$0xff]
    %v338 = vld [vmem:[%s8 + $0x38] sm:$0xff]
    %v339 = vld [vmem:[%s8 + $0x40] sm:$0xff]
    %v340 = vld [vmem:[%s8 + $0x48] sm:$0xff]
    %v341 = vld [vmem:[%s8 + $0x50] sm:$0xff]
    %v342 = vld [vmem:[%s8 + $0x58] sm:$0xff]
    %v343 = vld [vmem:[%s8 + $0x60] sm:$0xff]
    %v344 = vld [vmem:[%s8 + $0x68] sm:$0xff]
    %v345 = vld [vmem:[%s8 + $0x70] sm:$0xff]
    %v346 = vld [vmem:[%s8 + $0x78] sm:$0xff]
    %v347 = vld [vmem:[%s9] sm:$0x1]
    %v349 = vlaneseq
    %v350 = vshrl.u32 %v349, 7
    %v351 = vsub.s32 0, %v350
    %v352 = vrot.slane %v347, %v351
    %354 = vmatprep.subr.mxu0 0.0
    %355 = vmatpush1.msra.mxu0 %v331
    %356 = vmatprep.subr.mxu0 0.0
    %357 = vmatpush1.msra.mxu0 %v332
    %358 = vmatprep.subr.mxu0 0.0
    %359 = vmatpush1.msra.mxu0 %v333
    %360 = vmatprep.subr.mxu0 0.0
    %361 = vmatpush1.msra.mxu0 %v334
    %362 = vmatprep.subr.mxu0 0.0
    %363 = vmatpush1.msra.mxu0 %v335
    %364 = vmatprep.subr.mxu0 0.0
    %365 = vmatpush1.msra.mxu0 %v336
    %366 = vmatprep.subr.mxu0 0.0
    %367 = vmatpush1.msra.mxu0 %v337
    %368 = vmatprep.subr.mxu0 0.0
    %369 = vmatpush1.msra.mxu0 %v338
    %370 = vmatprep.subr.mxu0 0.0
    %371 = vmatpush1.msra.mxu0 %v339
    %372 = vmatprep.subr.mxu0 0.0
    %373 = vmatpush1.msra.mxu0 %v340
    %374 = vmatprep.subr.mxu0 0.0
    %375 = vmatpush1.msra.mxu0 %v341
    %376 = vmatprep.subr.mxu0 0.0
    %377 = vmatpush1.msra.mxu0 %v342
    %378 = vmatprep.subr.mxu0 0.0
    %379 = vmatpush1.msra.mxu0 %v343
    %380 = vmatprep.subr.mxu0 0.0
    %381 = vmatpush1.msra.mxu0 %v344
    %382 = vmatprep.subr.mxu0 0.0
    %383 = vmatpush1.msra.mxu0 %v345
    %384 = vmatprep.subr.mxu0 0.0
    %385 = vmatpush1.msra.mxu0 %v346
    %386 = vmatprep.subr.mxu0 0.0
    %387 = vmatpush1.msra.mxu0 0.0
    %388 = vmatprep.subr.mxu0 0.0
    %389 = vmatpush1.msra.mxu0 0.0
    %390 = vmatprep.subr.mxu0 0.0
    %391 = vmatpush1.msra.mxu0 0.0
    %392 = vmatprep.subr.mxu0 0.0
    %393 = vmatpush1.msra.mxu0 0.0
    %394 = vmatprep.subr.mxu0 0.0
    %395 = vmatpush1.msra.mxu0 0.0
    %396 = vmatprep.subr.mxu0 0.0
    %397 = vmatpush1.msra.mxu0 0.0
    %398 = vmatprep.subr.mxu0 0.0
    %399 = vmatpush1.msra.mxu0 0.0
    %400 = vmatprep.subr.mxu0 0.0
    %401 = vmatpush1.msra.mxu0 0.0
    %402 = vmatprep.subr.mxu0 0.0
    %403 = vmatpush1.msra.mxu0 0.0
    %404 = vmatprep.subr.mxu0 0.0
    %405 = vmatpush1.msra.mxu0 0.0
    %406 = vmatprep.subr.mxu0 0.0
    %407 = vmatpush1.msra.mxu0 0.0
    %408 = vmatprep.subr.mxu0 0.0
    %409 = vmatpush1.msra.mxu0 0.0
    %410 = vmatprep.subr.mxu0 0.0
    %411 = vmatpush1.msra.mxu0 0.0
    %412 = vmatprep.subr.mxu0 0.0
    %413 = vmatpush1.msra.mxu0 0.0
    %414 = vmatprep.subr.mxu0 0.0
    %415 = vmatpush1.msra.mxu0 0.0
    %416 = vmatprep.subr.mxu0 0.0
    %417 = vmatpush1.msra.mxu0 0.0
    %418 = vmatprep.mubr.f32.mxu0 0.0
    %419 = vmatmul.mubr.f32.gmra.mrb[0].mxu0 %v330
    %v420 = vpop.f32.mrb[0].mxu0
    %v421 = vadd.f32 %v352, %v420
    %v422 = vpop.f32.mrb[0].mxu0
    %423 = vdwg.mxu0
    %v424 = vld [vmem:[%s1] sm:$0xff]
    %v425 = vmul.f32 %v421, 1.442695
    %v426 = vpow.pop %v425
    %v427 = vmul.f32 %v424, %v426
    %429 = vrot.lane.b32.xlu0 %v421, 124
    %v430 = vpop.permute.xlu0 %429
    %v432 = vadd.f32 %v427, %v430
    %433 = vst.msk [vmem:[%s10] sm:$0xff] %vm61, %v432
    %v434 = vsel %vm61, %v421, 0.0
    %435 = vadd.xlane.f32.xlu0 %v434
    %v436 = vpop.xlane.xlu0 %435
    %p437 = scmp.eq.s32.totalorder 0, 0
    // Predicated region
    $region46: #{tpu_custom_call.1} parent=1 // pred_check
      %p438 = pneg %p437
    $region47: #{tpu_custom_call.1} parent=1 // pred_check_branch
      %440 = sbr.rel (%p438) target = $region49
    $region48: #{tpu_custom_call.1} parent=1 // pred_region
      %441 = vst [vmem:[#allocation5] sm:$0xff] %v436
    $region49: #{tpu_custom_call.1} parent=1 // pred_fallthru
      _
    %p442 = scmp.gt.s32.totalorder 0, 0
    // Predicated region
    $region50: #{tpu_custom_call.1} parent=1 // pred_check
      %p443 = pneg %p442
    $region51: #{tpu_custom_call.1} parent=1 // pred_check_branch
      %445 = sbr.rel (%p443) target = $region53
    $region52: #{tpu_custom_call.1} parent=1 // pred_region
      %v446 = vld [vmem:[#allocation5] sm:$0xff]
      %v447 = vadd.f32 %v446, %v436
      %448 = vst [vmem:[#allocation5] sm:$0xff] %v447
    $region53: #{tpu_custom_call.1} parent=1 // pred_fallthru
      _
    // Predicated region
    $region54: #{tpu_custom_call.1} parent=1 // pred_check
      _
    $region55: #{tpu_custom_call.1} parent=1 // pred_check_branch
      %450 = sbr.rel (0) target = $region57
    $region56: #{tpu_custom_call.1} parent=1 // pred_region
      _
    $region57: #{tpu_custom_call.1} parent=1 // pred_fallthru
      _
    // Predicated region
    $region58: #{tpu_custom_call.1} parent=1 // pred_check
      _
    $region59: #{tpu_custom_call.1} parent=1 // pred_check_branch
      %452 = sbr.rel (0) target = $region61
    $region60: #{tpu_custom_call.1} parent=1 // pred_region
      %s454 = ssub.s32 128, 128
      %455 = vsyncadd [#allocation4], %s454
      %s457 = sshll.u32 [#allocation5], 4
      %s458 = int_to_ptr.vmem [resolvable:$true] %s457
      %460 = dma.vmem_to_hbm [thread:$0]  %s458, 128, %s11, [#allocation4]
    $region61: #{tpu_custom_call.1} parent=1 // pred_fallthru
      _
    // Predicated region
    $region62: #{tpu_custom_call.1} parent=1 // pred_check
      _
    $region63: #{tpu_custom_call.1} parent=1 // pred_check_branch
      %462 = sbr.rel (0) target = $region65
    $region64: #{tpu_custom_call.1} parent=1 // pred_region
      _
    $region65: #{tpu_custom_call.1} parent=1 // pred_fallthru
      _
    // Predicated region
    $region66: #{tpu_custom_call.1} parent=1 // pred_check
      _
    $region67: #{tpu_custom_call.1} parent=1 // pred_check_branch
      %464 = sbr.rel (0) target = $region69
    $region68: #{tpu_custom_call.1} parent=1 // pred_region
      %465 = dma.done [#allocation4], 128
    $region69: #{tpu_custom_call.1} parent=1 // pred_fallthru
      _
    %466 = vsyncpa [#allocation3], 1
    %467 = vsyncpa [#allocation4], 1

</llo_original>
